<compile_context>
chip_gen: v7x
topology: tpu7x:2x2x1
jax: 0.10.0
libtpu: 0.0.40
codegen_flags: <defaults>
</compile_context>

<pallas_src>
import functools

import jax
import jax.numpy as jnp
from jax import lax
from jax.experimental import pallas as pl
from jax.experimental.pallas import tpu as pltpu


# ---------------------------------------------------------------------------
# Pallas kernel: VMEM im2col + single MXU matmul + BN affine + SiLU
# ---------------------------------------------------------------------------
def _conv_bn_silu_kernel(x_ref, w_ref, scale_ref, bias_ref, o_ref, patch_ref,
                         *, K, Cin, Ho, Wo, stride):
    # x_ref:     (Hp, Wp, Cin)        bf16  one zero-padded NHWC image
    # w_ref:     (Cout, K*K*Cin)      bf16  conv weight, column = (kh*K+kw)*Cin+ci
    # scale_ref: (Cout, 1)            f32   folded BN scale = gamma / sqrt(var+eps)
    # bias_ref:  (Cout, 1)            f32   folded BN bias  = beta - mean * scale
    # o_ref:     (Cout, Ho*Wo)        bf16  transposed, lane-dense output slab
    # patch_ref: (Ho*Wo, K*K*Cin)     bf16  VMEM scratch: im2col slab
    xt = x_ref[...]                                    # whole padded image in VMEM

    # Build the im2col slab in VMEM (not HBM): 9 windowed copies, one slab.
    for kh in range(K):
        for kw in range(K):
            if stride == 1:
                tap = xt[kh:kh + Ho, kw:kw + Wo, :]
            else:
                # TODO(synk): strided tap path untested (demo uses stride=1).
                tap = xt[kh:kh + (Ho - 1) * stride + 1:stride,
                         kw:kw + (Wo - 1) * stride + 1:stride, :]
            c0 = (kh * K + kw) * Cin
            # leading-dims collapse only (minor dim Cin unchanged) -> cheap
            patch_ref[:, c0:c0 + Cin] = tap.reshape(Ho * Wo, Cin)

    # Single matmul, contraction = K*K*Cin, output already transposed to
    # (Cout, Ho*Wo) so stores are unmasked full-lane vst (Ho*Wo multiple of 128).
    acc = lax.dot_general(
        w_ref[...], patch_ref[...],
        dimension_numbers=(((1,), (1,)), ((), ())),    # A @ B^T on the MXU
        preferred_element_type=jnp.float32)            # f32 accumulate

    # BN affine + SiLU in f32 on the accumulator (v5e VPU/EUP have no bf16);
    # narrow only at the store.
    y = acc * scale_ref[...] + bias_ref[...]
    o_ref[...] = (y * jax.nn.sigmoid(y)).astype(o_ref.dtype)


# ---------------------------------------------------------------------------
# BaseConv forward (wrapper: layout glue only — no im2col / no transpose in HBM
# on the output side; result comes back already in NC(HW) order)
# ---------------------------------------------------------------------------
def base_conv_forward(x_nchw, conv_w, bn_gamma, bn_beta, bn_mean, bn_var,
                      *, stride=1, eps=1e-3):
    """x_nchw: (N, Cin, H, W) float32.  conv_w: (Cout, Cin, K, K) (OIHW).

    Returns (N, Cout, Ho, Wo) in bfloat16 (cast to f32 downstream if needed).
    """
    N, Cin, H, W = x_nchw.shape
    Cout, _, K, _ = conv_w.shape
    pad = (K - 1) // 2
    Ho = (H + 2 * pad - K) // stride + 1
    Wo = (W + 2 * pad - K) // stride + 1
    Hp, Wp = H + 2 * pad, W + 2 * pad
    KKC = K * K * Cin

    # NCHW -> NHWC, single zero-pad pass, cast to bf16 for the MXU.
    x = jnp.transpose(x_nchw, (0, 2, 3, 1))
    x = jnp.pad(x, ((0, 0), (pad, pad), (pad, pad), (0, 0)))
    x = x.astype(jnp.bfloat16)

    # Conv weight OIHW -> (Cout, K, K, Cin) -> (Cout, K*K*Cin), matching the
    # im2col column order (kh*K + kw)*Cin + ci.
    w2 = jnp.transpose(conv_w, (0, 2, 3, 1)).reshape(Cout, KKC)
    w2 = w2.astype(jnp.bfloat16)

    # Fold inference-mode BatchNorm into per-channel scale/bias (f32, column
    # vectors so they broadcast along the lane dim of the (Cout, Ho*Wo) acc).
    inv_std = 1.0 / jnp.sqrt(bn_var + eps)
    scale = (bn_gamma * inv_std).reshape(Cout, 1).astype(jnp.float32)
    bias = (bn_beta - bn_mean * bn_gamma * inv_std).reshape(Cout, 1)
    bias = bias.astype(jnp.float32)

    kernel = functools.partial(_conv_bn_silu_kernel,
                               K=K, Cin=Cin, Ho=Ho, Wo=Wo, stride=stride)

    out = pl.pallas_call(
        kernel,
        out_shape=jax.ShapeDtypeStruct((N, Cout, Ho * Wo), jnp.bfloat16),
        grid_spec=pltpu.PrefetchScalarGridSpec(
            num_scalar_prefetch=0,
            grid=(N,),
            in_specs=[
                # one padded image per grid step (batch dim squeezed)
                pl.BlockSpec((None, Hp, Wp, Cin), lambda n: (n, 0, 0, 0)),
                # weight / BN params: resident across the whole grid
                pl.BlockSpec((Cout, KKC), lambda n: (0, 0)),
                pl.BlockSpec((Cout, 1), lambda n: (0, 0)),
                pl.BlockSpec((Cout, 1), lambda n: (0, 0)),
            ],
            out_specs=pl.BlockSpec((None, Cout, Ho * Wo), lambda n: (n, 0, 0)),
            scratch_shapes=[pltpu.VMEM((Ho * Wo, KKC), jnp.bfloat16)],
        ),
        compiler_params=pltpu.CompilerParams(
            # megacore-shard over batch; per-step footprint is tiny so the
            # default scoped VMEM limit is plenty on v5e/v6e/v7x (no explicit
            # vmem_limit_bytes — never request the full 64 MiB of a v7x TC).
            dimension_semantics=("parallel",),
        ),
    )(x, w2, scale, bias)

    # Output is already channel-major: just a (free) reshape to NCHW.
    return out.reshape(N, Cout, Ho, Wo)


# ---------------------------------------------------------------------------
# Pure-JAX reference for verification (inputs rounded to bf16 like the kernel)
# ---------------------------------------------------------------------------
def reference_forward(x_nchw, conv_w, bn_gamma, bn_beta, bn_mean, bn_var,
                      *, stride=1, eps=1e-3):
    K = conv_w.shape[-1]
    pad = (K - 1) // 2
    xb = x_nchw.astype(jnp.bfloat16).astype(jnp.float32)
    wb = conv_w.astype(jnp.bfloat16).astype(jnp.float32)
    y = lax.conv_general_dilated(
        xb, wb, window_strides=(stride, stride),
        padding=((pad, pad), (pad, pad)),
        dimension_numbers=("NCHW", "OIHW", "NCHW"),
        precision=lax.Precision.HIGHEST)
    g = bn_gamma.reshape(1, -1, 1, 1)
    b = bn_beta.reshape(1, -1, 1, 1)
    m = bn_mean.reshape(1, -1, 1, 1)
    v = bn_var.reshape(1, -1, 1, 1)
    y = (y - m) / jnp.sqrt(v + eps) * g + b
    return y * jax.nn.sigmoid(y)


if __name__ == "__main__":
    # BaseConv(in_channels=4, out_channels=8, ksize=3, stride=1, bias=False, act=True)
    N, Cin, H, W = 2, 4, 16, 16
    Cout, K, stride = 8, 3, 1

    key = jax.random.PRNGKey(0)
    k_x, k_w, k_g, k_b, k_m, k_v = jax.random.split(key, 6)

    x = jax.random.normal(k_x, (N, Cin, H, W), dtype=jnp.float32)
    conv_w = jax.random.normal(k_w, (Cout, Cin, K, K), dtype=jnp.float32) * 0.1
    bn_gamma = 1.0 + 0.1 * jax.random.normal(k_g, (Cout,), dtype=jnp.float32)
    bn_beta = 0.1 * jax.random.normal(k_b, (Cout,), dtype=jnp.float32)
    bn_mean = 0.05 * jax.random.normal(k_m, (Cout,), dtype=jnp.float32)
    bn_var = jnp.abs(jax.random.normal(k_v, (Cout,), dtype=jnp.float32)) + 0.5

    out = base_conv_forward(x, conv_w, bn_gamma, bn_beta, bn_mean, bn_var,
                            stride=stride, eps=1e-3)
    out = jax.block_until_ready(out)

    ref = reference_forward(x, conv_w, bn_gamma, bn_beta, bn_mean, bn_var,
                            stride=stride, eps=1e-3)

    assert out.shape == (N, Cout, H, W), out.shape
    # bf16 MXU operands + bf16 output store (f32 accumulation/epilogue) ->
    # compare against a bf16-rounded-input f32 reference with a loosened tol.
    out_f32 = out.astype(jnp.float32)
    assert jnp.allclose(out_f32, ref, atol=2e-2, rtol=2e-2), (
        float(jnp.max(jnp.abs(out_f32 - ref))))
    print("KERNEL_OK")
</pallas_src>

<mosaic_0001>
module attributes {stable_mosaic.version = 11 : i64} {
  func.func @_conv_bn_silu_kernel(%arg0: i32, %arg1: memref<1x18x18x4xbf16, #tpu.memory_space<vmem>>, %arg2: memref<8x36xbf16, #tpu.memory_space<vmem>>, %arg3: memref<8x1xf32, #tpu.memory_space<vmem>>, %arg4: memref<8x1xf32, #tpu.memory_space<vmem>>, %arg5: memref<1x8x256xbf16, #tpu.memory_space<vmem>>, %arg6: memref<256x36xbf16, #tpu.memory_space<vmem>>) attributes {dimension_semantics = [#tpu.dimension_semantics<parallel>], iteration_bounds = array<i64: 2>, scalar_prefetch = 0 : i64, scratch_operands = 1 : i64, tpu.core_type = #tpu.core_type<tc>, window_params = [{transform_indices = @transform_0, window_bounds = array<i64: 1, 18, 18, 4>}, {pipeline_mode = #tpu.pipeline_mode<synchronous>, transform_indices = @transform_1, window_bounds = array<i64: 8, 36>}, {pipeline_mode = #tpu.pipeline_mode<synchronous>, transform_indices = @transform_2, window_bounds = array<i64: 8, 1>}, {pipeline_mode = #tpu.pipeline_mode<synchronous>, transform_indices = @transform_3, window_bounds = array<i64: 8, 1>}, {transform_indices = @transform_4, window_bounds = array<i64: 1, 8, 256>}]} {
    %c0 = arith.constant 0 : index
    %c0_0 = arith.constant 0 : index
    %c0_1 = arith.constant 0 : index
    %c0_2 = arith.constant 0 : index
    %0 = vector.load %arg1[%c0, %c0_0, %c0_1, %c0_2] : memref<1x18x18x4xbf16, #tpu.memory_space<vmem>>, vector<1x18x18x4xbf16>
    %1 = vector.shape_cast %0 : vector<1x18x18x4xbf16> to vector<18x18x4xbf16>
    %2 = vector.extract_strided_slice %1 {offsets = [0, 0, 0], sizes = [16, 16, 4], strides = [1, 1, 1]} : vector<18x18x4xbf16> to vector<16x16x4xbf16>
    %3 = vector.shape_cast %2 : vector<16x16x4xbf16> to vector<256x4xbf16>
    %c0_3 = arith.constant 0 : index
    %c0_4 = arith.constant 0 : index
    %4 = vector.load %arg6[%c0_3, %c0_4] : memref<256x36xbf16, #tpu.memory_space<vmem>>, vector<256x4xbf16>
    tpu.vector_store %arg6[%c0_3, %c0_4], %3 {strides = array<i32>} : memref<256x36xbf16, #tpu.memory_space<vmem>>, vector<256x4xbf16>,
    %5 = vector.extract_strided_slice %1 {offsets = [0, 1, 0], sizes = [16, 16, 4], strides = [1, 1, 1]} : vector<18x18x4xbf16> to vector<16x16x4xbf16>
    %6 = vector.shape_cast %5 : vector<16x16x4xbf16> to vector<256x4xbf16>
    %c0_5 = arith.constant 0 : index
    %c4 = arith.constant 4 : index
    %7 = vector.load %arg6[%c0_5, %c4] : memref<256x36xbf16, #tpu.memory_space<vmem>>, vector<256x4xbf16>
    tpu.vector_store %arg6[%c0_5, %c4], %6 {strides = array<i32>} : memref<256x36xbf16, #tpu.memory_space<vmem>>, vector<256x4xbf16>,
    %8 = vector.extract_strided_slice %1 {offsets = [0, 2, 0], sizes = [16, 16, 4], strides = [1, 1, 1]} : vector<18x18x4xbf16> to vector<16x16x4xbf16>
    %9 = vector.shape_cast %8 : vector<16x16x4xbf16> to vector<256x4xbf16>
    %c0_6 = arith.constant 0 : index
    %c8 = arith.constant 8 : index
    %10 = vector.load %arg6[%c0_6, %c8] : memref<256x36xbf16, #tpu.memory_space<vmem>>, vector<256x4xbf16>
    tpu.vector_store %arg6[%c0_6, %c8], %9 {strides = array<i32>} : memref<256x36xbf16, #tpu.memory_space<vmem>>, vector<256x4xbf16>,
    %11 = vector.extract_strided_slice %1 {offsets = [1, 0, 0], sizes = [16, 16, 4], strides = [1, 1, 1]} : vector<18x18x4xbf16> to vector<16x16x4xbf16>
    %12 = vector.shape_cast %11 : vector<16x16x4xbf16> to vector<256x4xbf16>
    %c0_7 = arith.constant 0 : index
    %c12 = arith.constant 12 : index
    %13 = vector.load %arg6[%c0_7, %c12] : memref<256x36xbf16, #tpu.memory_space<vmem>>, vector<256x4xbf16>
    tpu.vector_store %arg6[%c0_7, %c12], %12 {strides = array<i32>} : memref<256x36xbf16, #tpu.memory_space<vmem>>, vector<256x4xbf16>,
    %14 = vector.extract_strided_slice %1 {offsets = [1, 1, 0], sizes = [16, 16, 4], strides = [1, 1, 1]} : vector<18x18x4xbf16> to vector<16x16x4xbf16>
    %15 = vector.shape_cast %14 : vector<16x16x4xbf16> to vector<256x4xbf16>
    %c0_8 = arith.constant 0 : index
    %c16 = arith.constant 16 : index
    %16 = vector.load %arg6[%c0_8, %c16] : memref<256x36xbf16, #tpu.memory_space<vmem>>, vector<256x4xbf16>
    tpu.vector_store %arg6[%c0_8, %c16], %15 {strides = array<i32>} : memref<256x36xbf16, #tpu.memory_space<vmem>>, vector<256x4xbf16>,
    %17 = vector.extract_strided_slice %1 {offsets = [1, 2, 0], sizes = [16, 16, 4], strides = [1, 1, 1]} : vector<18x18x4xbf16> to vector<16x16x4xbf16>
    %18 = vector.shape_cast %17 : vector<16x16x4xbf16> to vector<256x4xbf16>
    %c0_9 = arith.constant 0 : index
    %c20 = arith.constant 20 : index
    %19 = vector.load %arg6[%c0_9, %c20] : memref<256x36xbf16, #tpu.memory_space<vmem>>, vector<256x4xbf16>
    tpu.vector_store %arg6[%c0_9, %c20], %18 {strides = array<i32>} : memref<256x36xbf16, #tpu.memory_space<vmem>>, vector<256x4xbf16>,
    %20 = vector.extract_strided_slice %1 {offsets = [2, 0, 0], sizes = [16, 16, 4], strides = [1, 1, 1]} : vector<18x18x4xbf16> to vector<16x16x4xbf16>
    %21 = vector.shape_cast %20 : vector<16x16x4xbf16> to vector<256x4xbf16>
    %c0_10 = arith.constant 0 : index
    %c24 = arith.constant 24 : index
    %22 = vector.load %arg6[%c0_10, %c24] : memref<256x36xbf16, #tpu.memory_space<vmem>>, vector<256x4xbf16>
    tpu.vector_store %arg6[%c0_10, %c24], %21 {strides = array<i32>} : memref<256x36xbf16, #tpu.memory_space<vmem>>, vector<256x4xbf16>,
    %23 = vector.extract_strided_slice %1 {offsets = [2, 1, 0], sizes = [16, 16, 4], strides = [1, 1, 1]} : vector<18x18x4xbf16> to vector<16x16x4xbf16>
    %24 = vector.shape_cast %23 : vector<16x16x4xbf16> to vector<256x4xbf16>
    %c0_11 = arith.constant 0 : index
    %c28 = arith.constant 28 : index
    %25 = vector.load %arg6[%c0_11, %c28] : memref<256x36xbf16, #tpu.memory_space<vmem>>, vector<256x4xbf16>
    tpu.vector_store %arg6[%c0_11, %c28], %24 {strides = array<i32>} : memref<256x36xbf16, #tpu.memory_space<vmem>>, vector<256x4xbf16>,
    %26 = vector.extract_strided_slice %1 {offsets = [2, 2, 0], sizes = [16, 16, 4], strides = [1, 1, 1]} : vector<18x18x4xbf16> to vector<16x16x4xbf16>
    %27 = vector.shape_cast %26 : vector<16x16x4xbf16> to vector<256x4xbf16>
    %c0_12 = arith.constant 0 : index
    %c32 = arith.constant 32 : index
    %28 = vector.load %arg6[%c0_12, %c32] : memref<256x36xbf16, #tpu.memory_space<vmem>>, vector<256x4xbf16>
    tpu.vector_store %arg6[%c0_12, %c32], %27 {strides = array<i32>} : memref<256x36xbf16, #tpu.memory_space<vmem>>, vector<256x4xbf16>,
    %c0_13 = arith.constant 0 : index
    %c0_14 = arith.constant 0 : index
    %29 = vector.load %arg2[%c0_13, %c0_14] : memref<8x36xbf16, #tpu.memory_space<vmem>>, vector<8x36xbf16>
    %c0_15 = arith.constant 0 : index
    %c0_16 = arith.constant 0 : index
    %30 = vector.load %arg6[%c0_15, %c0_16] : memref<256x36xbf16, #tpu.memory_space<vmem>>, vector<256x36xbf16>
    %cst = arith.constant dense<0.000000e+00> : vector<8x256xf32>
    %31 = tpu.matmul %29, %30, %cst {dimension_numbers = #tpu.dot_dimension_numbers<[1], [1], [0], [0], [0, 0, 1, 0], [], []>} : vector<8x36xbf16>, vector<256x36xbf16>, vector<8x256xf32> -> vector<8x256xf32>
    %c0_17 = arith.constant 0 : index
    %c0_18 = arith.constant 0 : index
    %32 = vector.load %arg3[%c0_17, %c0_18] : memref<8x1xf32, #tpu.memory_space<vmem>>, vector<8x1xf32>
    %33 = vector.broadcast %32 : vector<8x1xf32> to vector<8x256xf32>
    %34 = arith.mulf %31, %33 : vector<8x256xf32>
    %c0_19 = arith.constant 0 : index
    %c0_20 = arith.constant 0 : index
    %35 = vector.load %arg4[%c0_19, %c0_20] : memref<8x1xf32, #tpu.memory_space<vmem>>, vector<8x1xf32>
    %36 = vector.broadcast %35 : vector<8x1xf32> to vector<8x256xf32>
    %37 = arith.addf %34, %36 : vector<8x256xf32>
    %38 = arith.negf %37 : vector<8x256xf32>
    %39 = math.exp %38 : vector<8x256xf32>
    %cst_21 = arith.constant 1.000000e+00 : f32
    %40 = vector.broadcast %cst_21 : f32 to vector<8x256xf32>
    %41 = arith.addf %40, %39 : vector<8x256xf32>
    %42 = arith.divf %40, %41 : vector<8x256xf32>
    %43 = arith.mulf %37, %42 : vector<8x256xf32>
    %44 = arith.truncf %43 : vector<8x256xf32> to vector<8x256xbf16>
    %c0_22 = arith.constant 0 : index
    %c0_23 = arith.constant 0 : index
    %c0_24 = arith.constant 0 : index
    %45 = vector.load %arg5[%c0_22, %c0_23, %c0_24] : memref<1x8x256xbf16, #tpu.memory_space<vmem>>, vector<1x8x256xbf16>
    %46 = vector.shape_cast %45 : vector<1x8x256xbf16> to vector<8x256xbf16>
    %47 = vector.shape_cast %44 : vector<8x256xbf16> to vector<1x8x256xbf16>
    tpu.vector_store %arg5[%c0_22, %c0_23, %c0_24], %47 {strides = array<i32>} : memref<1x8x256xbf16, #tpu.memory_space<vmem>>, vector<1x8x256xbf16>,
    return
  }
  func.func @transform_0(%arg0: i32) -> (i32, i32, i32, i32) {
    %c0_i32 = arith.constant 0 : i32
    %c0_i32_0 = arith.constant 0 : i32
    %c0_i32_1 = arith.constant 0 : i32
    %c0_i32_2 = arith.constant 0 : i32
    return %arg0, %c0_i32, %c0_i32_0, %c0_i32_1 : i32, i32, i32, i32
  }
  func.func @transform_1(%arg0: i32) -> (i32, i32) {
    %c0_i32 = arith.constant 0 : i32
    %c0_i32_0 = arith.constant 0 : i32
    %c0_i32_1 = arith.constant 0 : i32
    return %c0_i32, %c0_i32_0 : i32, i32
  }
  func.func @transform_2(%arg0: i32) -> (i32, i32) {
    %c0_i32 = arith.constant 0 : i32
    %c0_i32_0 = arith.constant 0 : i32
    %c0_i32_1 = arith.constant 0 : i32
    return %c0_i32, %c0_i32_0 : i32, i32
  }
  func.func @transform_3(%arg0: i32) -> (i32, i32) {
    %c0_i32 = arith.constant 0 : i32
    %c0_i32_0 = arith.constant 0 : i32
    %c0_i32_1 = arith.constant 0 : i32
    return %c0_i32, %c0_i32_0 : i32, i32
  }
  func.func @transform_4(%arg0: i32) -> (i32, i32, i32) {
    %c0_i32 = arith.constant 0 : i32
    %c0_i32_0 = arith.constant 0 : i32
    %c0_i32_1 = arith.constant 0 : i32
    return %arg0, %c0_i32, %c0_i32_0 : i32, i32, i32
  }
}

</mosaic_0001>

<llo_original>
// kernel: tpu_custom_call.1
$region0: #{tpu_custom_call.1}
  #allocation0 [shape = 'u32[]', space=smem, size = 0x4, offset = 0x4, fixed_abs, tag = 'smem constant byte address 0x4 - core index']
  #allocation1 [shape = 'u32[144,128]{1,0:T(1,128)}', space=vmem, size = 0x12000, scoped, tag = 'internal scratch']
  #allocation2 [shape = 'bf16[256,36]{1,0:T(16,128)(2,1)}', space=vmem, size = 0x10000, scoped, tag = 'scratch operand']
  %s0 = inlined_call_operand.vmem [shape: bf16[2,18,18,4], index: 0, kind: input, shape index: {}]
  %s1 = inlined_call_operand.vmem [shape: bf16[8,36], index: 1, kind: input, shape index: {}]
  %s2 = inlined_call_operand.vmem [shape: f32[8,1], index: 2, kind: input, shape index: {}]
  %s3 = inlined_call_operand.vmem [shape: f32[8,1], index: 3, kind: input, shape index: {}]
  %s4 = inlined_call_operand.hbm [shape: bf16[2,8,256], index: 4, kind: output, shape index: {}]
  %s5 = sld [smem:[#allocation0]]
  $region49: #{tpu_custom_call.1} parent=0
    _
  %s7 = ssub.s32 1, %s5
  %s8 = scalar_select 0, %s7, %s5
  $region1: #{tpu_custom_call.1} parent=0
    #allocation3 [shape = 'u8[8192]{0}', space=vmem, size = 0x2000, scoped, tag = 'output window, operand 0']
    #allocation4 [shape = 's32[2]{0}', space=sflag, size = 0x8, scoped, tag = 'scoped memory for tpu_custom_call.1']
    %9 = vsyncpa [#allocation4], 0
    %s10 = scalar_lea.sflag [#allocation4], 1
    %11 = vsyncpa %s10, 0
    loop: start=0, step=1, limit=4
    $region2: #{tpu_custom_call.1} parent=1 // loop_pre_header
      _
    $region3: #{tpu_custom_call.1} parent=1 // loop_header
      %s13 = sphi 0, %s17
      %p14 = scmp.ge.s32.totalorder %s13, 4
      %s23 = sphi 0, %s25
      %s26 = sphi 0, %s23
      %s27 = sphi 0, %s26
      %s43 = sphi 0, %s27
      %s47 = sphi 0, %s47
      %s49 = sphi 0, %s47
      %s50 = sphi 0, %s49
      %s64 = sphi 0, %s50
      %s68 = sphi 0, %s68
      %s70 = sphi 0, %s68
      %s71 = sphi 0, %s70
      %s85 = sphi 0, %s71
      %s89 = sphi 0, %s89
      %s91 = sphi 0, %s89
      %s92 = sphi 0, %s91
      %s106 = sphi 0, %s92
      %s112 = sphi 0, %s114
      %s115 = sphi 0, %s112
      %s116 = sphi 0, %s115
      %s132 = sphi 0, %s116
    $region4: #{tpu_custom_call.1} parent=1 // loop_header_branch
      %16 = sbr.rel (%p14) target = $region8
    $region5: #{tpu_custom_call.1} parent=1 // loop_body
      %s18 = ssub.s32 %s13, 1
      %s19 = ssub.s32 %s13, 2
      %s20 = sadd.s32 %s13, 1
      %s21 = ssub.s32 %s13, %s20
      %p22 = scmp.eq.s32.totalorder %s21, 0
      %s24 = sadd.s32 %s23, 1
      %s25 = scalar_select %p22, %s23, %s24
      %p28 = pneg %p22
      %p29 = scmp.eq.s32.totalorder %s13, 1
      %p30 = por %p28, %p29
      %p31 = scmp.ne.s32.totalorder %s23, %s26
      %p32 = scmp.eq.s32.totalorder %s13, 0
      %p33 = por %p31, %p32
      %p34 = scmp.ne.s32.totalorder %s23, %s26
      %p35 = scmp.eq.s32.totalorder %s18, 1
      %p36 = por %p34, %p35
      %p37 = scmp.ne.s32.totalorder %s26, %s27
      %p38 = scmp.eq.s32.totalorder %s18, 0
      %p39 = por %p37, %p38
      %p40 = scmp.ne.s32.totalorder %s26, %s27
      %p41 = scmp.eq.s32.totalorder %s19, 1
      %p42 = por %p40, %p41
      %p44 = scmp.ne.s32.totalorder %s27, %s43
      %p45 = scmp.eq.s32.totalorder %s19, 0
      %p46 = por %p44, %p45
      %s48 = sadd.s32 %s47, 1
      %p51 = scmp.eq.s32.totalorder %s13, 1
      %p52 = scmp.ne.s32.totalorder %s47, %s49
      %p53 = scmp.eq.s32.totalorder %s13, 0
      %p54 = por %p52, %p53
      %p55 = scmp.ne.s32.totalorder %s47, %s49
      %p56 = scmp.eq.s32.totalorder %s18, 1
      %p57 = por %p55, %p56
      %p58 = scmp.ne.s32.totalorder %s49, %s50
      %p59 = scmp.eq.s32.totalorder %s18, 0
      %p60 = por %p58, %p59
      %p61 = scmp.ne.s32.totalorder %s49, %s50
      %p62 = scmp.eq.s32.totalorder %s19, 1
      %p63 = por %p61, %p62
      %p65 = scmp.ne.s32.totalorder %s50, %s64
      %p66 = scmp.eq.s32.totalorder %s19, 0
      %p67 = por %p65, %p66
      %s69 = sadd.s32 %s68, 1
      %p72 = scmp.eq.s32.totalorder %s13, 1
      %p73 = scmp.ne.s32.totalorder %s68, %s70
      %p74 = scmp.eq.s32.totalorder %s13, 0
      %p75 = por %p73, %p74
      %p76 = scmp.ne.s32.totalorder %s68, %s70
      %p77 = scmp.eq.s32.totalorder %s18, 1
      %p78 = por %p76, %p77
      %p79 = scmp.ne.s32.totalorder %s70, %s71
      %p80 = scmp.eq.s32.totalorder %s18, 0
      %p81 = por %p79, %p80
      %p82 = scmp.ne.s32.totalorder %s70, %s71
      %p83 = scmp.eq.s32.totalorder %s19, 1
      %p84 = por %p82, %p83
      %p86 = scmp.ne.s32.totalorder %s71, %s85
      %p87 = scmp.eq.s32.totalorder %s19, 0
      %p88 = por %p86, %p87
      %s90 = sadd.s32 %s89, 1
      %p93 = scmp.eq.s32.totalorder %s13, 1
      %p94 = scmp.ne.s32.totalorder %s89, %s91
      %p95 = scmp.eq.s32.totalorder %s13, 0
      %p96 = por %p94, %p95
      %p97 = scmp.ne.s32.totalorder %s89, %s91
      %p98 = scmp.eq.s32.totalorder %s18, 1
      %p99 = por %p97, %p98
      %p100 = scmp.ne.s32.totalorder %s91, %s92
      %p101 = scmp.eq.s32.totalorder %s18, 0
      %p102 = por %p100, %p101
      %p103 = scmp.ne.s32.totalorder %s91, %s92
      %p104 = scmp.eq.s32.totalorder %s19, 1
      %p105 = por %p103, %p104
      %p107 = scmp.ne.s32.totalorder %s92, %s106
      %p108 = scmp.eq.s32.totalorder %s19, 0
      %p109 = por %p107, %p108
      %s110 = ssub.s32 %s13, %s20
      %p111 = scmp.eq.s32.totalorder %s110, 0
      %s113 = sadd.s32 %s112, 1
      %s114 = scalar_select %p111, %s112, %s113
      %p117 = pneg %p111
      %p118 = scmp.eq.s32.totalorder %s13, 1
      %p119 = por %p117, %p118
      %p120 = scmp.ne.s32.totalorder %s112, %s115
      %p121 = scmp.eq.s32.totalorder %s13, 0
      %p122 = por %p120, %p121
      %p123 = scmp.ne.s32.totalorder %s112, %s115
      %p124 = scmp.eq.s32.totalorder %s18, 1
      %p125 = por %p123, %p124
      %p126 = scmp.ne.s32.totalorder %s115, %s116
      %p127 = scmp.eq.s32.totalorder %s18, 0
      %p128 = por %p126, %p127
      %p129 = scmp.ne.s32.totalorder %s115, %s116
      %p130 = scmp.eq.s32.totalorder %s19, 1
      %p131 = por %p129, %p130
      %p133 = scmp.ne.s32.totalorder %s116, %s132
      %p134 = scmp.eq.s32.totalorder %s19, 0
      %p135 = por %p133, %p134
      %p136 = scmp.le.s32.totalorder 1, %s13
      %p137 = scmp.lt.s32.totalorder %s13, 3
      %p138 = pnand %p136, %p137
      %p139 = pneg %p138
      // Predicated region
      $region9: #{tpu_custom_call.1} parent=5 // pred_check
        _
      $region10: #{tpu_custom_call.1} parent=5 // pred_check_branch
        %141 = sbr.rel (%p138) target = $region12
      $region11: #{tpu_custom_call.1} parent=5 // pred_region
        %s142 = ssub.s32 %s13, 1
        // Predicated region
        $region13: #{tpu_custom_call.1} parent=11 // pred_check
          %p143 = pneg %p60
        $region14: #{tpu_custom_call.1} parent=11 // pred_check_branch
          %145 = sbr.rel (%p143) target = $region16
        $region15: #{tpu_custom_call.1} parent=11 // pred_region
          _
        $region16: #{tpu_custom_call.1} parent=11 // pred_fallthru
          _
        // Predicated region
        $region17: #{tpu_custom_call.1} parent=11 // pred_check
          %p146 = pneg %p81
        $region18: #{tpu_custom_call.1} parent=11 // pred_check_branch
          %148 = sbr.rel (%p146) target = $region20
        $region19: #{tpu_custom_call.1} parent=11 // pred_region
          _
        $region20: #{tpu_custom_call.1} parent=11 // pred_fallthru
          _
        // Predicated region
        $region21: #{tpu_custom_call.1} parent=11 // pred_check
          %p149 = pneg %p102
        $region22: #{tpu_custom_call.1} parent=11 // pred_check_branch
          %151 = sbr.rel (%p149) target = $region24
        $region23: #{tpu_custom_call.1} parent=11 // pred_region
          _
        $region24: #{tpu_custom_call.1} parent=11 // pred_fallthru
          _
      $region12: #{tpu_custom_call.1} parent=5 // pred_fallthru
        _
      %p152 = scmp.lt.s32.totalorder %s13, 2
      // Predicated region
      $region25: #{tpu_custom_call.1} parent=5 // pred_check
        %p153 = pneg %p152
      $region26: #{tpu_custom_call.1} parent=5 // pred_check_branch
        %155 = sbr.rel (%p153) target = $region28
      $region27: #{tpu_custom_call.1} parent=5 // pred_region
        // Predicated region
        $region29: #{tpu_custom_call.1} parent=27 // pred_check
          %p156 = pneg %p33
        $region30: #{tpu_custom_call.1} parent=27 // pred_check_branch
          %158 = sbr.rel (%p156) target = $region32
        $region31: #{tpu_custom_call.1} parent=27 // pred_region
          %p159 = scmp.lt.s32.totalorder %s13, 1
          %s160 = scalar_select %p159, %s13, 1
          %s161 = smul.addr %s160, 54
          %s162 = smul.addr %s161, 4
          %s163 = scalar_lea.vmem %s0, %s162
        $region32: #{tpu_custom_call.1} parent=27 // pred_fallthru
          _
      $region28: #{tpu_custom_call.1} parent=5 // pred_fallthru
        _
      %p164 = scmp.le.s32.totalorder 1, %s13
      %p165 = scmp.lt.s32.totalorder %s13, 3
      %p166 = pnand %p164, %p165
      %p167 = pneg %p166
      // Predicated region
      $region33: #{tpu_custom_call.1} parent=5 // pred_check
        _
      $region34: #{tpu_custom_call.1} parent=5 // pred_check_branch
        %169 = sbr.rel (%p166) target = $region36
      $region35: #{tpu_custom_call.1} parent=5 // pred_region
        %s170 = ssub.s32 %s13, 1
        %p171 = scmp.lt.s32.totalorder %s18, 1
        %s172 = scalar_select %p171, %s18, 1
        %s173 = smul.addr %s172, 54
        %s174 = smul.addr %s173, 4
        %s175 = scalar_lea.vmem %s0, %s174
        %p176 = pneg %p39
        %p177 = pneg %p36
        %p178 = pneg %p60
        %p179 = pneg %p57
        %p180 = pneg %p81
        %p181 = pneg %p78
        %p182 = pneg %p102
        %p183 = pneg %p99
        %p184 = pneg %p128
        %p185 = pneg %p125
        %s186 = sand.u32 %s115, 1
        %s187 = scalar_lea.sflag [#allocation4], %s186
        %s188 = sand.u32 %s115, 1
        %s189 = smul.addr %s188, 8
        %s190 = scalar_lea.vmem [#allocation3], %s189
        %p191 = scmp.lt.s32.totalorder %s18, 1
        %s192 = scalar_select %p191, %s18, 1
        %s193 = smul.addr %s192, 54
        %s194 = smul.addr %s193, 4
        %s195 = scalar_lea.vmem %s0, %s194
        %v197 = vld [vmem:[%s195] sm:$0xf]
        %v198 = vld [vmem:[%s195 + $0x4] sm:$0xf]
        %v199 = vld [vmem:[%s195 + $0x8] sm:$0x1]
        %v200 = vld [vmem:[%s195 + $0xc] sm:$0xf]
        %v201 = vld [vmem:[%s195 + $0x10] sm:$0xf]
        %v202 = vld [vmem:[%s195 + $0x14] sm:$0x1]
        %v203 = vld [vmem:[%s195 + $0x18] sm:$0xf]
        %v204 = vld [vmem:[%s195 + $0x1c] sm:$0xf]
        %v205 = vld [vmem:[%s195 + $0x20] sm:$0x1]
        %v206 = vld [vmem:[%s195 + $0x24] sm:$0xf]
        %v207 = vld [vmem:[%s195 + $0x28] sm:$0xf]
        %v208 = vld [vmem:[%s195 + $0x2c] sm:$0x1]
        %v209 = vld [vmem:[%s195 + $0x30] sm:$0xf]
        %v210 = vld [vmem:[%s195 + $0x34] sm:$0xf]
        %v211 = vld [vmem:[%s195 + $0x38] sm:$0x1]
        %v212 = vld [vmem:[%s195 + $0x3c] sm:$0xf]
        %v213 = vld [vmem:[%s195 + $0x40] sm:$0xf]
        %v214 = vld [vmem:[%s195 + $0x44] sm:$0x1]
        %v215 = vld [vmem:[%s195 + $0x48] sm:$0xf]
        %v216 = vld [vmem:[%s195 + $0x4c] sm:$0xf]
        %v217 = vld [vmem:[%s195 + $0x50] sm:$0x1]
        %v218 = vld [vmem:[%s195 + $0x54] sm:$0xf]
        %v219 = vld [vmem:[%s195 + $0x58] sm:$0xf]
        %v220 = vld [vmem:[%s195 + $0x5c] sm:$0x1]
        %v221 = vld [vmem:[%s195 + $0x60] sm:$0xf]
        %v222 = vld [vmem:[%s195 + $0x64] sm:$0xf]
        %v223 = vld [vmem:[%s195 + $0x68] sm:$0x1]
        %v224 = vld [vmem:[%s195 + $0x6c] sm:$0xf]
        %v225 = vld [vmem:[%s195 + $0x70] sm:$0xf]
        %v226 = vld [vmem:[%s195 + $0x74] sm:$0x1]
        %v227 = vld [vmem:[%s195 + $0x78] sm:$0xf]
        %v228 = vld [vmem:[%s195 + $0x7c] sm:$0xf]
        %v229 = vld [vmem:[%s195 + $0x80] sm:$0x1]
        %v230 = vld [vmem:[%s195 + $0x84] sm:$0xf]
        %v231 = vld [vmem:[%s195 + $0x88] sm:$0xf]
        %v232 = vld [vmem:[%s195 + $0x8c] sm:$0x1]
        %v233 = vld [vmem:[%s195 + $0x90] sm:$0xf]
        %v234 = vld [vmem:[%s195 + $0x94] sm:$0xf]
        %v235 = vld [vmem:[%s195 + $0x98] sm:$0x1]
        %v236 = vld [vmem:[%s195 + $0x9c] sm:$0xf]
        %v237 = vld [vmem:[%s195 + $0xa0] sm:$0xf]
        %v238 = vld [vmem:[%s195 + $0xa4] sm:$0x1]
        %v239 = vld [vmem:[%s195 + $0xa8] sm:$0xf]
        %v240 = vld [vmem:[%s195 + $0xac] sm:$0xf]
        %v241 = vld [vmem:[%s195 + $0xb0] sm:$0x1]
        %v242 = vld [vmem:[%s195 + $0xb4] sm:$0xf]
        %v243 = vld [vmem:[%s195 + $0xb8] sm:$0xf]
        %v244 = vld [vmem:[%s195 + $0xbc] sm:$0x1]
        %v245 = vld [vmem:[%s195 + $0xc0] sm:$0xf]
        %v246 = vld [vmem:[%s195 + $0xc4] sm:$0xf]
        %v247 = vld [vmem:[%s195 + $0xc8] sm:$0x1]
        %v248 = vld [vmem:[%s195 + $0xcc] sm:$0xf]
        %v249 = vld [vmem:[%s195 + $0xd0] sm:$0xf]
        %v250 = vld [vmem:[%s195 + $0xd4] sm:$0x1]
        %v283 = vunpack.c.l.b16 %v197
        %v284 = vunpack.c.l.b16 %v198
        %v285 = vunpack.c.l.b16 %v200
        %v286 = vunpack.c.l.b16 %v201
        %v287 = vunpack.c.l.b16 %v203
        %v288 = vunpack.c.l.b16 %v204
        %v289 = vunpack.c.l.b16 %v206
        %v290 = vunpack.c.l.b16 %v207
        %v291 = vunpack.c.l.b16 %v209
        %v292 = vunpack.c.l.b16 %v210
        %v293 = vunpack.c.l.b16 %v212
        %v294 = vunpack.c.l.b16 %v213
        %v295 = vunpack.c.l.b16 %v215
        %v296 = vunpack.c.l.b16 %v216
        %v297 = vunpack.c.l.b16 %v218
        %v298 = vunpack.c.l.b16 %v219
        %v299 = vunpack.c.l.b16 %v221
        %v300 = vunpack.c.l.b16 %v222
        %v301 = vunpack.c.l.b16 %v224
        %v302 = vunpack.c.l.b16 %v225
        %v303 = vunpack.c.l.b16 %v227
        %v304 = vunpack.c.l.b16 %v228
        %v305 = vunpack.c.l.b16 %v230
        %v306 = vunpack.c.l.b16 %v231
        %v307 = vunpack.c.l.b16 %v233
        %v308 = vunpack.c.l.b16 %v234
        %v309 = vunpack.c.l.b16 %v236
        %v310 = vunpack.c.l.b16 %v237
        %v311 = vunpack.c.l.b16 %v239
        %v312 = vunpack.c.l.b16 %v240
        %v313 = vunpack.c.l.b16 %v242
        %v314 = vunpack.c.l.b16 %v243
        %v315 = vpack.c.b16 %v284, %v283
        %v316 = vpack.c.b16 %v286, %v285
        %v317 = vpack.c.b16 %v288, %v287
        %v318 = vpack.c.b16 %v290, %v289
        %v319 = vpack.c.b16 %v292, %v291
        %v320 = vpack.c.b16 %v294, %v293
        %v321 = vpack.c.b16 %v296, %v295
        %v322 = vpack.c.b16 %v298, %v297
        %v323 = vpack.c.b16 %v300, %v299
        %v324 = vpack.c.b16 %v302, %v301
        %v325 = vpack.c.b16 %v304, %v303
        %v326 = vpack.c.b16 %v306, %v305
        %v327 = vpack.c.b16 %v308, %v307
        %v328 = vpack.c.b16 %v310, %v309
        %v329 = vpack.c.b16 %v312, %v311
        %v330 = vpack.c.b16 %v314, %v313
        %vm347 = vcmask 31744
        %348 = vst.msk [vmem:[#allocation2] sm:$0xff] %vm347, %v315
        %349 = vst.msk [vmem:[#allocation2 + $0x8] sm:$0xff] %vm347, %v316
        %350 = vst.msk [vmem:[#allocation2 + $0x10] sm:$0xff] %vm347, %v317
        %351 = vst.msk [vmem:[#allocation2 + $0x18] sm:$0xff] %vm347, %v318
        %352 = vst.msk [vmem:[#allocation2 + $0x20] sm:$0xff] %vm347, %v319
        %353 = vst.msk [vmem:[#allocation2 + $0x28] sm:$0xff] %vm347, %v320
        %354 = vst.msk [vmem:[#allocation2 + $0x30] sm:$0xff] %vm347, %v321
        %355 = vst.msk [vmem:[#allocation2 + $0x38] sm:$0xff] %vm347, %v322
        %356 = vst.msk [vmem:[#allocation2 + $0x40] sm:$0xff] %vm347, %v323
        %357 = vst.msk [vmem:[#allocation2 + $0x48] sm:$0xff] %vm347, %v324
        %358 = vst.msk [vmem:[#allocation2 + $0x50] sm:$0xff] %vm347, %v325
        %359 = vst.msk [vmem:[#allocation2 + $0x58] sm:$0xff] %vm347, %v326
        %360 = vst.msk [vmem:[#allocation2 + $0x60] sm:$0xff] %vm347, %v327
        %361 = vst.msk [vmem:[#allocation2 + $0x68] sm:$0xff] %vm347, %v328
        %362 = vst.msk [vmem:[#allocation2 + $0x70] sm:$0xff] %vm347, %v329
        %363 = vst.msk [vmem:[#allocation2 + $0x78] sm:$0xff] %vm347, %v330
        %vm364 = vsmask.f32 3328
        %vm365 = vsmask.f32 7440
        %vm366 = vmor %vm364, %vm365
        %v368 = vshrl.u32 %v197, 16
        %v370 = vrot.slane %v368, 4
        %v371 = vshll.u32 %v197, 16
        %v373 = vrot.slane %v371, 5
        %v374 = vor.u32 %v370, %v373
        %v375 = vrot.slane %v374, 4
        %v377 = vshll.u32 %v198, 16
        %v379 = vrot.slane %v377, 5
        %v380 = vsel %vm366, %v375, %v379
        %v381 = vshrl.u32 %v198, 16
        %v383 = vrot.slane %v381, 4
        %v384 = vor.u32 %v383, %v379
        %v385 = vrot.slane %v384, 4
        %v387 = vshll.u32 %v199, 16
        %v389 = vrot.slane %v387, 5
        %v390 = vsel %vm366, %v385, %v389
        %v392 = vshrl.u32 %v200, 16
        %v394 = vrot.slane %v392, 4
        %v395 = vshll.u32 %v200, 16
        %v397 = vrot.slane %v395, 5
        %v398 = vor.u32 %v394, %v397
        %v399 = vrot.slane %v398, 4
        %v401 = vshll.u32 %v201, 16
        %v403 = vrot.slane %v401, 5
        %v404 = vsel %vm366, %v399, %v403
        %v405 = vshrl.u32 %v201, 16
        %v407 = vrot.slane %v405, 4
        %v408 = vor.u32 %v407, %v403
        %v409 = vrot.slane %v408, 4
        %v411 = vshll.u32 %v202, 16
        %v413 = vrot.slane %v411, 5
        %v414 = vsel %vm366, %v409, %v413
        %v416 = vshrl.u32 %v203, 16
        %v418 = vrot.slane %v416, 4
        %v419 = vshll.u32 %v203, 16
        %v421 = vrot.slane %v419, 5
        %v422 = vor.u32 %v418, %v421
        %v423 = vrot.slane %v422, 4
        %v425 = vshll.u32 %v204, 16
        %v427 = vrot.slane %v425, 5
        %v428 = vsel %vm366, %v423, %v427
        %v429 = vshrl.u32 %v204, 16
        %v431 = vrot.slane %v429, 4
        %v432 = vor.u32 %v431, %v427
        %v433 = vrot.slane %v432, 4
        %v435 = vshll.u32 %v205, 16
        %v437 = vrot.slane %v435, 5
        %v438 = vsel %vm366, %v433, %v437
        %v440 = vshrl.u32 %v206, 16
        %v442 = vrot.slane %v440, 4
        %v443 = vshll.u32 %v206, 16
        %v445 = vrot.slane %v443, 5
        %v446 = vor.u32 %v442, %v445
        %v447 = vrot.slane %v446, 4
        %v449 = vshll.u32 %v207, 16
        %v451 = vrot.slane %v449, 5
        %v452 = vsel %vm366, %v447, %v451
        %v453 = vshrl.u32 %v207, 16
        %v455 = vrot.slane %v453, 4
        %v456 = vor.u32 %v455, %v451
        %v457 = vrot.slane %v456, 4
        %v459 = vshll.u32 %v208, 16
        %v461 = vrot.slane %v459, 5
        %v462 = vsel %vm366, %v457, %v461
        %v464 = vshrl.u32 %v209, 16
        %v466 = vrot.slane %v464, 4
        %v467 = vshll.u32 %v209, 16
        %v469 = vrot.slane %v467, 5
        %v470 = vor.u32 %v466, %v469
        %v471 = vrot.slane %v470, 4
        %v473 = vshll.u32 %v210, 16
        %v475 = vrot.slane %v473, 5
        %v476 = vsel %vm366, %v471, %v475
        %v477 = vshrl.u32 %v210, 16
        %v479 = vrot.slane %v477, 4
        %v480 = vor.u32 %v479, %v475
        %v481 = vrot.slane %v480, 4
        %v483 = vshll.u32 %v211, 16
        %v485 = vrot.slane %v483, 5
        %v486 = vsel %vm366, %v481, %v485
        %v488 = vshrl.u32 %v212, 16
        %v490 = vrot.slane %v488, 4
        %v491 = vshll.u32 %v212, 16
        %v493 = vrot.slane %v491, 5
        %v494 = vor.u32 %v490, %v493
        %v495 = vrot.slane %v494, 4
        %v497 = vshll.u32 %v213, 16
        %v499 = vrot.slane %v497, 5
        %v500 = vsel %vm366, %v495, %v499
        %v501 = vshrl.u32 %v213, 16
        %v503 = vrot.slane %v501, 4
        %v504 = vor.u32 %v503, %v499
        %v505 = vrot.slane %v504, 4
        %v507 = vshll.u32 %v214, 16
        %v509 = vrot.slane %v507, 5
        %v510 = vsel %vm366, %v505, %v509
        %v512 = vshrl.u32 %v215, 16
        %v514 = vrot.slane %v512, 4
        %v515 = vshll.u32 %v215, 16
        %v517 = vrot.slane %v515, 5
        %v518 = vor.u32 %v514, %v517
        %v519 = vrot.slane %v518, 4
        %v521 = vshll.u32 %v216, 16
        %v523 = vrot.slane %v521, 5
        %v524 = vsel %vm366, %v519, %v523
        %v525 = vshrl.u32 %v216, 16
        %v527 = vrot.slane %v525, 4
        %v528 = vor.u32 %v527, %v523
        %v529 = vrot.slane %v528, 4
        %v531 = vshll.u32 %v217, 16
        %v533 = vrot.slane %v531, 5
        %v534 = vsel %vm366, %v529, %v533
        %v536 = vshrl.u32 %v218, 16
        %v538 = vrot.slane %v536, 4
        %v539 = vshll.u32 %v218, 16
        %v541 = vrot.slane %v539, 5
        %v542 = vor.u32 %v538, %v541
        %v543 = vrot.slane %v542, 4
        %v545 = vshll.u32 %v219, 16
        %v547 = vrot.slane %v545, 5
        %v548 = vsel %vm366, %v543, %v547
        %v549 = vshrl.u32 %v219, 16
        %v551 = vrot.slane %v549, 4
        %v552 = vor.u32 %v551, %v547
        %v553 = vrot.slane %v552, 4
        %v555 = vshll.u32 %v220, 16
        %v557 = vrot.slane %v555, 5
        %v558 = vsel %vm366, %v553, %v557
        %v560 = vshrl.u32 %v221, 16
        %v562 = vrot.slane %v560, 4
        %v563 = vshll.u32 %v221, 16
        %v565 = vrot.slane %v563, 5
        %v566 = vor.u32 %v562, %v565
        %v567 = vrot.slane %v566, 4
        %v569 = vshll.u32 %v222, 16
        %v571 = vrot.slane %v569, 5
        %v572 = vsel %vm366, %v567, %v571
        %v573 = vshrl.u32 %v222, 16
        %v575 = vrot.slane %v573, 4
        %v576 = vor.u32 %v575, %v571
        %v577 = vrot.slane %v576, 4
        %v579 = vshll.u32 %v223, 16
        %v581 = vrot.slane %v579, 5
        %v582 = vsel %vm366, %v577, %v581
        %v584 = vshrl.u32 %v224, 16
        %v586 = vrot.slane %v584, 4
        %v587 = vshll.u32 %v224, 16
        %v589 = vrot.slane %v587, 5
        %v590 = vor.u32 %v586, %v589
        %v591 = vrot.slane %v590, 4
        %v593 = vshll.u32 %v225, 16
        %v595 = vrot.slane %v593, 5
        %v596 = vsel %vm366, %v591, %v595
        %v597 = vshrl.u32 %v225, 16
        %v599 = vrot.slane %v597, 4
        %v600 = vor.u32 %v599, %v595
        %v601 = vrot.slane %v600, 4
        %v603 = vshll.u32 %v226, 16
        %v605 = vrot.slane %v603, 5
        %v606 = vsel %vm366, %v601, %v605
        %v608 = vshrl.u32 %v227, 16
        %v610 = vrot.slane %v608, 4
        %v611 = vshll.u32 %v227, 16
        %v613 = vrot.slane %v611, 5
        %v614 = vor.u32 %v610, %v613
        %v615 = vrot.slane %v614, 4
        %v617 = vshll.u32 %v228, 16
        %v619 = vrot.slane %v617, 5
        %v620 = vsel %vm366, %v615, %v619
        %v621 = vshrl.u32 %v228, 16
        %v623 = vrot.slane %v621, 4
        %v624 = vor.u32 %v623, %v619
        %v625 = vrot.slane %v624, 4
        %v627 = vshll.u32 %v229, 16
        %v629 = vrot.slane %v627, 5
        %v630 = vsel %vm366, %v625, %v629
        %v632 = vshrl.u32 %v230, 16
        %v634 = vrot.slane %v632, 4
        %v635 = vshll.u32 %v230, 16
        %v637 = vrot.slane %v635, 5
        %v638 = vor.u32 %v634, %v637
        %v639 = vrot.slane %v638, 4
        %v641 = vshll.u32 %v231, 16
        %v643 = vrot.slane %v641, 5
        %v644 = vsel %vm366, %v639, %v643
        %v645 = vshrl.u32 %v231, 16
        %v647 = vrot.slane %v645, 4
        %v648 = vor.u32 %v647, %v643
        %v649 = vrot.slane %v648, 4
        %v651 = vshll.u32 %v232, 16
        %v653 = vrot.slane %v651, 5
        %v654 = vsel %vm366, %v649, %v653
        %v656 = vshrl.u32 %v233, 16
        %v658 = vrot.slane %v656, 4
        %v659 = vshll.u32 %v233, 16
        %v661 = vrot.slane %v659, 5
        %v662 = vor.u32 %v658, %v661
        %v663 = vrot.slane %v662, 4
        %v665 = vshll.u32 %v234, 16
        %v667 = vrot.slane %v665, 5
        %v668 = vsel %vm366, %v663, %v667
        %v669 = vshrl.u32 %v234, 16
        %v671 = vrot.slane %v669, 4
        %v672 = vor.u32 %v671, %v667
        %v673 = vrot.slane %v672, 4
        %v675 = vshll.u32 %v235, 16
        %v677 = vrot.slane %v675, 5
        %v678 = vsel %vm366, %v673, %v677
        %v680 = vshrl.u32 %v236, 16
        %v682 = vrot.slane %v680, 4
        %v683 = vshll.u32 %v236, 16
        %v685 = vrot.slane %v683, 5
        %v686 = vor.u32 %v682, %v685
        %v687 = vrot.slane %v686, 4
        %v689 = vshll.u32 %v237, 16
        %v691 = vrot.slane %v689, 5
        %v692 = vsel %vm366, %v687, %v691
        %v693 = vshrl.u32 %v237, 16
        %v695 = vrot.slane %v693, 4
        %v696 = vor.u32 %v695, %v691
        %v697 = vrot.slane %v696, 4
        %v699 = vshll.u32 %v238, 16
        %v701 = vrot.slane %v699, 5
        %v702 = vsel %vm366, %v697, %v701
        %v704 = vshrl.u32 %v239, 16
        %v706 = vrot.slane %v704, 4
        %v707 = vshll.u32 %v239, 16
        %v709 = vrot.slane %v707, 5
        %v710 = vor.u32 %v706, %v709
        %v711 = vrot.slane %v710, 4
        %v713 = vshll.u32 %v240, 16
        %v715 = vrot.slane %v713, 5
        %v716 = vsel %vm366, %v711, %v715
        %v717 = vshrl.u32 %v240, 16
        %v719 = vrot.slane %v717, 4
        %v720 = vor.u32 %v719, %v715
        %v721 = vrot.slane %v720, 4
        %v723 = vshll.u32 %v241, 16
        %v725 = vrot.slane %v723, 5
        %v726 = vsel %vm366, %v721, %v725
        %v728 = vshrl.u32 %v242, 16
        %v730 = vrot.slane %v728, 4
        %v731 = vshll.u32 %v242, 16
        %v733 = vrot.slane %v731, 5
        %v734 = vor.u32 %v730, %v733
        %v735 = vrot.slane %v734, 4
        %v737 = vshll.u32 %v243, 16
        %v739 = vrot.slane %v737, 5
        %v740 = vsel %vm366, %v735, %v739
        %v741 = vshrl.u32 %v243, 16
        %v743 = vrot.slane %v741, 4
        %v744 = vor.u32 %v743, %v739
        %v745 = vrot.slane %v744, 4
        %v747 = vshll.u32 %v244, 16
        %v749 = vrot.slane %v747, 5
        %v750 = vsel %vm366, %v745, %v749
        %v751 = vunpack.c.l.b16 %v380
        %v752 = vunpack.c.l.b16 %v390
        %v753 = vunpack.c.l.b16 %v404
        %v754 = vunpack.c.l.b16 %v414
        %v755 = vunpack.c.l.b16 %v428
        %v756 = vunpack.c.l.b16 %v438
        %v757 = vunpack.c.l.b16 %v452
        %v758 = vunpack.c.l.b16 %v462
        %v759 = vunpack.c.l.b16 %v476
        %v760 = vunpack.c.l.b16 %v486
        %v761 = vunpack.c.l.b16 %v500
        %v762 = vunpack.c.l.b16 %v510
        %v763 = vunpack.c.l.b16 %v524
        %v764 = vunpack.c.l.b16 %v534
        %v765 = vunpack.c.l.b16 %v548
        %v766 = vunpack.c.l.b16 %v558
        %v767 = vunpack.c.l.b16 %v572
        %v768 = vunpack.c.l.b16 %v582
        %v769 = vunpack.c.l.b16 %v596
        %v770 = vunpack.c.l.b16 %v606
        %v771 = vunpack.c.l.b16 %v620
        %v772 = vunpack.c.l.b16 %v630
        %v773 = vunpack.c.l.b16 %v644
        %v774 = vunpack.c.l.b16 %v654
        %v775 = vunpack.c.l.b16 %v668
        %v776 = vunpack.c.l.b16 %v678
        %v777 = vunpack.c.l.b16 %v692
        %v778 = vunpack.c.l.b16 %v702
        %v779 = vunpack.c.l.b16 %v716
        %v780 = vunpack.c.l.b16 %v726
        %v781 = vunpack.c.l.b16 %v740
        %v782 = vunpack.c.l.b16 %v750
        %v783 = vpack.c.b16 %v752, %v751
        %v784 = vpack.c.b16 %v754, %v753
        %v785 = vpack.c.b16 %v756, %v755
        %v786 = vpack.c.b16 %v758, %v757
        %v787 = vpack.c.b16 %v760, %v759
        %v788 = vpack.c.b16 %v762, %v761
        %v789 = vpack.c.b16 %v764, %v763
        %v790 = vpack.c.b16 %v766, %v765
        %v791 = vpack.c.b16 %v768, %v767
        %v792 = vpack.c.b16 %v770, %v769
        %v793 = vpack.c.b16 %v772, %v771
        %v794 = vpack.c.b16 %v774, %v773
        %v795 = vpack.c.b16 %v776, %v775
        %v796 = vpack.c.b16 %v778, %v777
        %v797 = vpack.c.b16 %v780, %v779
        %v798 = vpack.c.b16 %v782, %v781
        %799 = vrot.lane.b32.xlu0 %v783, 4
        %v800 = vpop.permute.xlu0 %799
        %801 = vrot.lane.b32.xlu0 %v784, 4
        %v802 = vpop.permute.xlu0 %801
        %803 = vrot.lane.b32.xlu0 %v785, 4
        %v804 = vpop.permute.xlu0 %803
        %805 = vrot.lane.b32.xlu0 %v786, 4
        %v806 = vpop.permute.xlu0 %805
        %807 = vrot.lane.b32.xlu0 %v787, 4
        %v808 = vpop.permute.xlu0 %807
        %809 = vrot.lane.b32.xlu0 %v788, 4
        %v810 = vpop.permute.xlu0 %809
        %811 = vrot.lane.b32.xlu0 %v789, 4
        %v812 = vpop.permute.xlu0 %811
        %813 = vrot.lane.b32.xlu0 %v790, 4
        %v814 = vpop.permute.xlu0 %813
        %815 = vrot.lane.b32.xlu0 %v791, 4
        %v816 = vpop.permute.xlu0 %815
        %817 = vrot.lane.b32.xlu0 %v792, 4
        %v818 = vpop.permute.xlu0 %817
        %819 = vrot.lane.b32.xlu0 %v793, 4
        %v820 = vpop.permute.xlu0 %819
        %821 = vrot.lane.b32.xlu0 %v794, 4
        %v822 = vpop.permute.xlu0 %821
        %823 = vrot.lane.b32.xlu0 %v795, 4
        %v824 = vpop.permute.xlu0 %823
        %825 = vrot.lane.b32.xlu0 %v796, 4
        %v826 = vpop.permute.xlu0 %825
        %827 = vrot.lane.b32.xlu0 %v797, 4
        %v828 = vpop.permute.xlu0 %827
        %829 = vrot.lane.b32.xlu0 %v798, 4
        %v830 = vpop.permute.xlu0 %829
        %vm847 = vcmask 64544
        %848 = vst.msk [vmem:[#allocation2] sm:$0xff] %vm847, %v800
        %849 = vst.msk [vmem:[#allocation2 + $0x8] sm:$0xff] %vm847, %v802
        %850 = vst.msk [vmem:[#allocation2 + $0x10] sm:$0xff] %vm847, %v804
        %851 = vst.msk [vmem:[#allocation2 + $0x18] sm:$0xff] %vm847, %v806
        %852 = vst.msk [vmem:[#allocation2 + $0x20] sm:$0xff] %vm847, %v808
        %853 = vst.msk [vmem:[#allocation2 + $0x28] sm:$0xff] %vm847, %v810
        %854 = vst.msk [vmem:[#allocation2 + $0x30] sm:$0xff] %vm847, %v812
        %855 = vst.msk [vmem:[#allocation2 + $0x38] sm:$0xff] %vm847, %v814
        %856 = vst.msk [vmem:[#allocation2 + $0x40] sm:$0xff] %vm847, %v816
        %857 = vst.msk [vmem:[#allocation2 + $0x48] sm:$0xff] %vm847, %v818
        %858 = vst.msk [vmem:[#allocation2 + $0x50] sm:$0xff] %vm847, %v820
        %859 = vst.msk [vmem:[#allocation2 + $0x58] sm:$0xff] %vm847, %v822
        %860 = vst.msk [vmem:[#allocation2 + $0x60] sm:$0xff] %vm847, %v824
        %861 = vst.msk [vmem:[#allocation2 + $0x68] sm:$0xff] %vm847, %v826
        %862 = vst.msk [vmem:[#allocation2 + $0x70] sm:$0xff] %vm847, %v828
        %863 = vst.msk [vmem:[#allocation2 + $0x78] sm:$0xff] %vm847, %v830
        %vm880 = vcmask 1042432
        %vm881 = vcmask 1046532
        %vm882 = vmor %vm880, %vm881
        %v883 = vrot.slane %v197, 5
        %v884 = vrot.slane %v883, 4
        %v885 = vrot.slane %v198, 5
        %v886 = vsel %vm882, %v884, %v885
        %v887 = vrot.slane %v885, 4
        %v888 = vrot.slane %v199, 5
        %v889 = vsel %vm882, %v887, %v888
        %v890 = vrot.slane %v200, 5
        %v891 = vrot.slane %v890, 4
        %v892 = vrot.slane %v201, 5
        %v893 = vsel %vm882, %v891, %v892
        %v894 = vrot.slane %v892, 4
        %v895 = vrot.slane %v202, 5
        %v896 = vsel %vm882, %v894, %v895
        %v897 = vrot.slane %v203, 5
        %v898 = vrot.slane %v897, 4
        %v899 = vrot.slane %v204, 5
        %v900 = vsel %vm882, %v898, %v899
        %v901 = vrot.slane %v899, 4
        %v902 = vrot.slane %v205, 5
        %v903 = vsel %vm882, %v901, %v902
        %v904 = vrot.slane %v206, 5
        %v905 = vrot.slane %v904, 4
        %v906 = vrot.slane %v207, 5
        %v907 = vsel %vm882, %v905, %v906
        %v908 = vrot.slane %v906, 4
        %v909 = vrot.slane %v208, 5
        %v910 = vsel %vm882, %v908, %v909
        %v911 = vrot.slane %v209, 5
        %v912 = vrot.slane %v911, 4
        %v913 = vrot.slane %v210, 5
        %v914 = vsel %vm882, %v912, %v913
        %v915 = vrot.slane %v913, 4
        %v916 = vrot.slane %v211, 5
        %v917 = vsel %vm882, %v915, %v916
        %v918 = vrot.slane %v212, 5
        %v919 = vrot.slane %v918, 4
        %v920 = vrot.slane %v213, 5
        %v921 = vsel %vm882, %v919, %v920
        %v922 = vrot.slane %v920, 4
        %v923 = vrot.slane %v214, 5
        %v924 = vsel %vm882, %v922, %v923
        %v925 = vrot.slane %v215, 5
        %v926 = vrot.slane %v925, 4
        %v927 = vrot.slane %v216, 5
        %v928 = vsel %vm882, %v926, %v927
        %v929 = vrot.slane %v927, 4
        %v930 = vrot.slane %v217, 5
        %v931 = vsel %vm882, %v929, %v930
        %v932 = vrot.slane %v218, 5
        %v933 = vrot.slane %v932, 4
        %v934 = vrot.slane %v219, 5
        %v935 = vsel %vm882, %v933, %v934
        %v936 = vrot.slane %v934, 4
        %v937 = vrot.slane %v220, 5
        %v938 = vsel %vm882, %v936, %v937
        %v939 = vrot.slane %v221, 5
        %v940 = vrot.slane %v939, 4
        %v941 = vrot.slane %v222, 5
        %v942 = vsel %vm882, %v940, %v941
        %v943 = vrot.slane %v941, 4
        %v944 = vrot.slane %v223, 5
        %v945 = vsel %vm882, %v943, %v944
        %v946 = vrot.slane %v224, 5
        %v947 = vrot.slane %v946, 4
        %v948 = vrot.slane %v225, 5
        %v949 = vsel %vm882, %v947, %v948
        %v950 = vrot.slane %v948, 4
        %v951 = vrot.slane %v226, 5
        %v952 = vsel %vm882, %v950, %v951
        %v953 = vrot.slane %v227, 5
        %v954 = vrot.slane %v953, 4
        %v955 = vrot.slane %v228, 5
        %v956 = vsel %vm882, %v954, %v955
        %v957 = vrot.slane %v955, 4
        %v958 = vrot.slane %v229, 5
        %v959 = vsel %vm882, %v957, %v958
        %v960 = vrot.slane %v230, 5
        %v961 = vrot.slane %v960, 4
        %v962 = vrot.slane %v231, 5
        %v963 = vsel %vm882, %v961, %v962
        %v964 = vrot.slane %v962, 4
        %v965 = vrot.slane %v232, 5
        %v966 = vsel %vm882, %v964, %v965
        %v967 = vrot.slane %v233, 5
        %v968 = vrot.slane %v967, 4
        %v969 = vrot.slane %v234, 5
        %v970 = vsel %vm882, %v968, %v969
        %v971 = vrot.slane %v969, 4
        %v972 = vrot.slane %v235, 5
        %v973 = vsel %vm882, %v971, %v972
        %v974 = vrot.slane %v236, 5
        %v975 = vrot.slane %v974, 4
        %v976 = vrot.slane %v237, 5
        %v977 = vsel %vm882, %v975, %v976
        %v978 = vrot.slane %v976, 4
        %v979 = vrot.slane %v238, 5
        %v980 = vsel %vm882, %v978, %v979
        %v981 = vrot.slane %v239, 5
        %v982 = vrot.slane %v981, 4
        %v983 = vrot.slane %v240, 5
        %v984 = vsel %vm882, %v982, %v983
        %v985 = vrot.slane %v983, 4
        %v986 = vrot.slane %v241, 5
        %v987 = vsel %vm882, %v985, %v986
        %v988 = vrot.slane %v242, 5
        %v989 = vrot.slane %v988, 4
        %v990 = vrot.slane %v243, 5
        %v991 = vsel %vm882, %v989, %v990
        %v992 = vrot.slane %v990, 4
        %v993 = vrot.slane %v244, 5
        %v994 = vsel %vm882, %v992, %v993
        %v995 = vunpack.c.l.b16 %v886
        %v996 = vunpack.c.l.b16 %v889
        %v997 = vunpack.c.l.b16 %v893
        %v998 = vunpack.c.l.b16 %v896
        %v999 = vunpack.c.l.b16 %v900
        %v1000 = vunpack.c.l.b16 %v903
        %v1001 = vunpack.c.l.b16 %v907
        %v1002 = vunpack.c.l.b16 %v910
        %v1003 = vunpack.c.l.b16 %v914
        %v1004 = vunpack.c.l.b16 %v917
        %v1005 = vunpack.c.l.b16 %v921
        %v1006 = vunpack.c.l.b16 %v924
        %v1007 = vunpack.c.l.b16 %v928
        %v1008 = vunpack.c.l.b16 %v931
        %v1009 = vunpack.c.l.b16 %v935
        %v1010 = vunpack.c.l.b16 %v938
        %v1011 = vunpack.c.l.b16 %v942
        %v1012 = vunpack.c.l.b16 %v945
        %v1013 = vunpack.c.l.b16 %v949
        %v1014 = vunpack.c.l.b16 %v952
        %v1015 = vunpack.c.l.b16 %v956
        %v1016 = vunpack.c.l.b16 %v959
        %v1017 = vunpack.c.l.b16 %v963
        %v1018 = vunpack.c.l.b16 %v966
        %v1019 = vunpack.c.l.b16 %v970
        %v1020 = vunpack.c.l.b16 %v973
        %v1021 = vunpack.c.l.b16 %v977
        %v1022 = vunpack.c.l.b16 %v980
        %v1023 = vunpack.c.l.b16 %v984
        %v1024 = vunpack.c.l.b16 %v987
        %v1025 = vunpack.c.l.b16 %v991
        %v1026 = vunpack.c.l.b16 %v994
        %v1027 = vpack.c.b16 %v996, %v995
        %v1028 = vpack.c.b16 %v998, %v997
        %v1029 = vpack.c.b16 %v1000, %v999
        %v1030 = vpack.c.b16 %v1002, %v1001
        %v1031 = vpack.c.b16 %v1004, %v1003
        %v1032 = vpack.c.b16 %v1006, %v1005
        %v1033 = vpack.c.b16 %v1008, %v1007
        %v1034 = vpack.c.b16 %v1010, %v1009
        %v1035 = vpack.c.b16 %v1012, %v1011
        %v1036 = vpack.c.b16 %v1014, %v1013
        %v1037 = vpack.c.b16 %v1016, %v1015
        %v1038 = vpack.c.b16 %v1018, %v1017
        %v1039 = vpack.c.b16 %v1020, %v1019
        %v1040 = vpack.c.b16 %v1022, %v1021
        %v1041 = vpack.c.b16 %v1024, %v1023
        %v1042 = vpack.c.b16 %v1026, %v1025
        %1043 = vrot.lane.b32.xlu0 %v1027, 8
        %v1044 = vpop.permute.xlu0 %1043
        %1045 = vrot.lane.b32.xlu0 %v1028, 8
        %v1046 = vpop.permute.xlu0 %1045
        %1047 = vrot.lane.b32.xlu0 %v1029, 8
        %v1048 = vpop.permute.xlu0 %1047
        %1049 = vrot.lane.b32.xlu0 %v1030, 8
        %v1050 = vpop.permute.xlu0 %1049
        %1051 = vrot.lane.b32.xlu0 %v1031, 8
        %v1052 = vpop.permute.xlu0 %1051
        %1053 = vrot.lane.b32.xlu0 %v1032, 8
        %v1054 = vpop.permute.xlu0 %1053
        %1055 = vrot.lane.b32.xlu0 %v1033, 8
        %v1056 = vpop.permute.xlu0 %1055
        %1057 = vrot.lane.b32.xlu0 %v1034, 8
        %v1058 = vpop.permute.xlu0 %1057
        %1059 = vrot.lane.b32.xlu0 %v1035, 8
        %v1060 = vpop.permute.xlu0 %1059
        %1061 = vrot.lane.b32.xlu0 %v1036, 8
        %v1062 = vpop.permute.xlu0 %1061
        %1063 = vrot.lane.b32.xlu0 %v1037, 8
        %v1064 = vpop.permute.xlu0 %1063
        %1065 = vrot.lane.b32.xlu0 %v1038, 8
        %v1066 = vpop.permute.xlu0 %1065
        %1067 = vrot.lane.b32.xlu0 %v1039, 8
        %v1068 = vpop.permute.xlu0 %1067
        %1069 = vrot.lane.b32.xlu0 %v1040, 8
        %v1070 = vpop.permute.xlu0 %1069
        %1071 = vrot.lane.b32.xlu0 %v1041, 8
        %v1072 = vpop.permute.xlu0 %1071
        %1073 = vrot.lane.b32.xlu0 %v1042, 8
        %v1074 = vpop.permute.xlu0 %1073
        %vm1091 = vcmask 97344
        %1092 = vst.msk [vmem:[#allocation2] sm:$0xff] %vm1091, %v1044
        %1093 = vst.msk [vmem:[#allocation2 + $0x8] sm:$0xff] %vm1091, %v1046
        %1094 = vst.msk [vmem:[#allocation2 + $0x10] sm:$0xff] %vm1091, %v1048
        %1095 = vst.msk [vmem:[#allocation2 + $0x18] sm:$0xff] %vm1091, %v1050
        %1096 = vst.msk [vmem:[#allocation2 + $0x20] sm:$0xff] %vm1091, %v1052
        %1097 = vst.msk [vmem:[#allocation2 + $0x28] sm:$0xff] %vm1091, %v1054
        %1098 = vst.msk [vmem:[#allocation2 + $0x30] sm:$0xff] %vm1091, %v1056
        %1099 = vst.msk [vmem:[#allocation2 + $0x38] sm:$0xff] %vm1091, %v1058
        %1100 = vst.msk [vmem:[#allocation2 + $0x40] sm:$0xff] %vm1091, %v1060
        %1101 = vst.msk [vmem:[#allocation2 + $0x48] sm:$0xff] %vm1091, %v1062
        %1102 = vst.msk [vmem:[#allocation2 + $0x50] sm:$0xff] %vm1091, %v1064
        %1103 = vst.msk [vmem:[#allocation2 + $0x58] sm:$0xff] %vm1091, %v1066
        %1104 = vst.msk [vmem:[#allocation2 + $0x60] sm:$0xff] %vm1091, %v1068
        %1105 = vst.msk [vmem:[#allocation2 + $0x68] sm:$0xff] %vm1091, %v1070
        %1106 = vst.msk [vmem:[#allocation2 + $0x70] sm:$0xff] %vm1091, %v1072
        %1107 = vst.msk [vmem:[#allocation2 + $0x78] sm:$0xff] %vm1091, %v1074
        %v1110 = vunpack.c.l.b16 %v245
        %v1111 = vunpack.c.l.b16 %v246
        %v1112 = vpack.c.b16 %v1111, %v1110
        %1113 = vrot.lane.b32.xlu0 %v316, 12
        %v1114 = vpop.permute.xlu0 %1113
        %1115 = vrot.lane.b32.xlu0 %v317, 12
        %v1116 = vpop.permute.xlu0 %1115
        %1117 = vrot.lane.b32.xlu0 %v318, 12
        %v1118 = vpop.permute.xlu0 %1117
        %1119 = vrot.lane.b32.xlu0 %v319, 12
        %v1120 = vpop.permute.xlu0 %1119
        %1121 = vrot.lane.b32.xlu0 %v320, 12
        %v1122 = vpop.permute.xlu0 %1121
        %1123 = vrot.lane.b32.xlu0 %v321, 12
        %v1124 = vpop.permute.xlu0 %1123
        %1125 = vrot.lane.b32.xlu0 %v322, 12
        %v1126 = vpop.permute.xlu0 %1125
        %1127 = vrot.lane.b32.xlu0 %v323, 12
        %v1128 = vpop.permute.xlu0 %1127
        %1129 = vrot.lane.b32.xlu0 %v324, 12
        %v1130 = vpop.permute.xlu0 %1129
        %1131 = vrot.lane.b32.xlu0 %v325, 12
        %v1132 = vpop.permute.xlu0 %1131
        %1133 = vrot.lane.b32.xlu0 %v326, 12
        %v1134 = vpop.permute.xlu0 %1133
        %1135 = vrot.lane.b32.xlu0 %v327, 12
        %v1136 = vpop.permute.xlu0 %1135
        %1137 = vrot.lane.b32.xlu0 %v328, 12
        %v1138 = vpop.permute.xlu0 %1137
        %1139 = vrot.lane.b32.xlu0 %v329, 12
        %v1140 = vpop.permute.xlu0 %1139
        %1141 = vrot.lane.b32.xlu0 %v330, 12
        %v1142 = vpop.permute.xlu0 %1141
        %1143 = vrot.lane.b32.xlu0 %v1112, 12
        %v1144 = vpop.permute.xlu0 %1143
        %vm1161 = vcmask 130144
        %1162 = vst.msk [vmem:[#allocation2] sm:$0xff] %vm1161, %v1114
        %1163 = vst.msk [vmem:[#allocation2 + $0x8] sm:$0xff] %vm1161, %v1116
        %1164 = vst.msk [vmem:[#allocation2 + $0x10] sm:$0xff] %vm1161, %v1118
        %1165 = vst.msk [vmem:[#allocation2 + $0x18] sm:$0xff] %vm1161, %v1120
        %1166 = vst.msk [vmem:[#allocation2 + $0x20] sm:$0xff] %vm1161, %v1122
        %1167 = vst.msk [vmem:[#allocation2 + $0x28] sm:$0xff] %vm1161, %v1124
        %1168 = vst.msk [vmem:[#allocation2 + $0x30] sm:$0xff] %vm1161, %v1126
        %1169 = vst.msk [vmem:[#allocation2 + $0x38] sm:$0xff] %vm1161, %v1128
        %1170 = vst.msk [vmem:[#allocation2 + $0x40] sm:$0xff] %vm1161, %v1130
        %1171 = vst.msk [vmem:[#allocation2 + $0x48] sm:$0xff] %vm1161, %v1132
        %1172 = vst.msk [vmem:[#allocation2 + $0x50] sm:$0xff] %vm1161, %v1134
        %1173 = vst.msk [vmem:[#allocation2 + $0x58] sm:$0xff] %vm1161, %v1136
        %1174 = vst.msk [vmem:[#allocation2 + $0x60] sm:$0xff] %vm1161, %v1138
        %1175 = vst.msk [vmem:[#allocation2 + $0x68] sm:$0xff] %vm1161, %v1140
        %1176 = vst.msk [vmem:[#allocation2 + $0x70] sm:$0xff] %vm1161, %v1142
        %1177 = vst.msk [vmem:[#allocation2 + $0x78] sm:$0xff] %vm1161, %v1144
        %v1179 = vshrl.u32 %v245, 16
        %v1181 = vrot.slane %v1179, 4
        %v1182 = vshll.u32 %v245, 16
        %v1184 = vrot.slane %v1182, 5
        %v1185 = vor.u32 %v1181, %v1184
        %v1186 = vrot.slane %v1185, 4
        %v1188 = vshll.u32 %v246, 16
        %v1190 = vrot.slane %v1188, 5
        %v1191 = vsel %vm366, %v1186, %v1190
        %v1192 = vshrl.u32 %v246, 16
        %v1194 = vrot.slane %v1192, 4
        %v1195 = vor.u32 %v1194, %v1190
        %v1196 = vrot.slane %v1195, 4
        %v1198 = vshll.u32 %v247, 16
        %v1200 = vrot.slane %v1198, 5
        %v1201 = vsel %vm366, %v1196, %v1200
        %v1202 = vunpack.c.l.b16 %v1191
        %v1203 = vunpack.c.l.b16 %v1201
        %v1204 = vpack.c.b16 %v1203, %v1202
        %1205 = vrot.lane.b32.xlu0 %v784, 16
        %v1206 = vpop.permute.xlu0 %1205
        %1207 = vrot.lane.b32.xlu0 %v785, 16
        %v1208 = vpop.permute.xlu0 %1207
        %1209 = vrot.lane.b32.xlu0 %v786, 16
        %v1210 = vpop.permute.xlu0 %1209
        %1211 = vrot.lane.b32.xlu0 %v787, 16
        %v1212 = vpop.permute.xlu0 %1211
        %1213 = vrot.lane.b32.xlu0 %v788, 16
        %v1214 = vpop.permute.xlu0 %1213
        %1215 = vrot.lane.b32.xlu0 %v789, 16
        %v1216 = vpop.permute.xlu0 %1215
        %1217 = vrot.lane.b32.xlu0 %v790, 16
        %v1218 = vpop.permute.xlu0 %1217
        %1219 = vrot.lane.b32.xlu0 %v791, 16
        %v1220 = vpop.permute.xlu0 %1219
        %1221 = vrot.lane.b32.xlu0 %v792, 16
        %v1222 = vpop.permute.xlu0 %1221
        %1223 = vrot.lane.b32.xlu0 %v793, 16
        %v1224 = vpop.permute.xlu0 %1223
        %1225 = vrot.lane.b32.xlu0 %v794, 16
        %v1226 = vpop.permute.xlu0 %1225
        %1227 = vrot.lane.b32.xlu0 %v795, 16
        %v1228 = vpop.permute.xlu0 %1227
        %1229 = vrot.lane.b32.xlu0 %v796, 16
        %v1230 = vpop.permute.xlu0 %1229
        %1231 = vrot.lane.b32.xlu0 %v797, 16
        %v1232 = vpop.permute.xlu0 %1231
        %1233 = vrot.lane.b32.xlu0 %v798, 16
        %v1234 = vpop.permute.xlu0 %1233
        %1235 = vrot.lane.b32.xlu0 %v1204, 16
        %v1236 = vpop.permute.xlu0 %1235
        %vm1253 = vcmask 162944
        %1254 = vst.msk [vmem:[#allocation2] sm:$0xff] %vm1253, %v1206
        %1255 = vst.msk [vmem:[#allocation2 + $0x8] sm:$0xff] %vm1253, %v1208
        %1256 = vst.msk [vmem:[#allocation2 + $0x10] sm:$0xff] %vm1253, %v1210
        %1257 = vst.msk [vmem:[#allocation2 + $0x18] sm:$0xff] %vm1253, %v1212
        %1258 = vst.msk [vmem:[#allocation2 + $0x20] sm:$0xff] %vm1253, %v1214
        %1259 = vst.msk [vmem:[#allocation2 + $0x28] sm:$0xff] %vm1253, %v1216
        %1260 = vst.msk [vmem:[#allocation2 + $0x30] sm:$0xff] %vm1253, %v1218
        %1261 = vst.msk [vmem:[#allocation2 + $0x38] sm:$0xff] %vm1253, %v1220
        %1262 = vst.msk [vmem:[#allocation2 + $0x40] sm:$0xff] %vm1253, %v1222
        %1263 = vst.msk [vmem:[#allocation2 + $0x48] sm:$0xff] %vm1253, %v1224
        %1264 = vst.msk [vmem:[#allocation2 + $0x50] sm:$0xff] %vm1253, %v1226
        %1265 = vst.msk [vmem:[#allocation2 + $0x58] sm:$0xff] %vm1253, %v1228
        %1266 = vst.msk [vmem:[#allocation2 + $0x60] sm:$0xff] %vm1253, %v1230
        %1267 = vst.msk [vmem:[#allocation2 + $0x68] sm:$0xff] %vm1253, %v1232
        %1268 = vst.msk [vmem:[#allocation2 + $0x70] sm:$0xff] %vm1253, %v1234
        %1269 = vst.msk [vmem:[#allocation2 + $0x78] sm:$0xff] %vm1253, %v1236
        %v1271 = vrot.slane %v245, 5
        %v1272 = vrot.slane %v1271, 4
        %v1273 = vrot.slane %v246, 5
        %v1274 = vsel %vm882, %v1272, %v1273
        %v1275 = vrot.slane %v1273, 4
        %v1276 = vrot.slane %v247, 5
        %v1277 = vsel %vm882, %v1275, %v1276
        %v1278 = vunpack.c.l.b16 %v1274
        %v1279 = vunpack.c.l.b16 %v1277
        %v1280 = vpack.c.b16 %v1279, %v1278
        %1281 = vrot.lane.b32.xlu0 %v1028, 20
        %v1282 = vpop.permute.xlu0 %1281
        %1283 = vrot.lane.b32.xlu0 %v1029, 20
        %v1284 = vpop.permute.xlu0 %1283
        %1285 = vrot.lane.b32.xlu0 %v1030, 20
        %v1286 = vpop.permute.xlu0 %1285
        %1287 = vrot.lane.b32.xlu0 %v1031, 20
        %v1288 = vpop.permute.xlu0 %1287
        %1289 = vrot.lane.b32.xlu0 %v1032, 20
        %v1290 = vpop.permute.xlu0 %1289
        %1291 = vrot.lane.b32.xlu0 %v1033, 20
        %v1292 = vpop.permute.xlu0 %1291
        %1293 = vrot.lane.b32.xlu0 %v1034, 20
        %v1294 = vpop.permute.xlu0 %1293
        %1295 = vrot.lane.b32.xlu0 %v1035, 20
        %v1296 = vpop.permute.xlu0 %1295
        %1297 = vrot.lane.b32.xlu0 %v1036, 20
        %v1298 = vpop.permute.xlu0 %1297
        %1299 = vrot.lane.b32.xlu0 %v1037, 20
        %v1300 = vpop.permute.xlu0 %1299
        %1301 = vrot.lane.b32.xlu0 %v1038, 20
        %v1302 = vpop.permute.xlu0 %1301
        %1303 = vrot.lane.b32.xlu0 %v1039, 20
        %v1304 = vpop.permute.xlu0 %1303
        %1305 = vrot.lane.b32.xlu0 %v1040, 20
        %v1306 = vpop.permute.xlu0 %1305
        %1307 = vrot.lane.b32.xlu0 %v1041, 20
        %v1308 = vpop.permute.xlu0 %1307
        %1309 = vrot.lane.b32.xlu0 %v1042, 20
        %v1310 = vpop.permute.xlu0 %1309
        %1311 = vrot.lane.b32.xlu0 %v1280, 20
        %v1312 = vpop.permute.xlu0 %1311
        %vm1329 = vcmask 195744
        %1330 = vst.msk [vmem:[#allocation2] sm:$0xff] %vm1329, %v1282
        %1331 = vst.msk [vmem:[#allocation2 + $0x8] sm:$0xff] %vm1329, %v1284
        %1332 = vst.msk [vmem:[#allocation2 + $0x10] sm:$0xff] %vm1329, %v1286
        %1333 = vst.msk [vmem:[#allocation2 + $0x18] sm:$0xff] %vm1329, %v1288
        %1334 = vst.msk [vmem:[#allocation2 + $0x20] sm:$0xff] %vm1329, %v1290
        %1335 = vst.msk [vmem:[#allocation2 + $0x28] sm:$0xff] %vm1329, %v1292
        %1336 = vst.msk [vmem:[#allocation2 + $0x30] sm:$0xff] %vm1329, %v1294
        %1337 = vst.msk [vmem:[#allocation2 + $0x38] sm:$0xff] %vm1329, %v1296
        %1338 = vst.msk [vmem:[#allocation2 + $0x40] sm:$0xff] %vm1329, %v1298
        %1339 = vst.msk [vmem:[#allocation2 + $0x48] sm:$0xff] %vm1329, %v1300
        %1340 = vst.msk [vmem:[#allocation2 + $0x50] sm:$0xff] %vm1329, %v1302
        %1341 = vst.msk [vmem:[#allocation2 + $0x58] sm:$0xff] %vm1329, %v1304
        %1342 = vst.msk [vmem:[#allocation2 + $0x60] sm:$0xff] %vm1329, %v1306
        %1343 = vst.msk [vmem:[#allocation2 + $0x68] sm:$0xff] %vm1329, %v1308
        %1344 = vst.msk [vmem:[#allocation2 + $0x70] sm:$0xff] %vm1329, %v1310
        %1345 = vst.msk [vmem:[#allocation2 + $0x78] sm:$0xff] %vm1329, %v1312
        %v1348 = vunpack.c.l.b16 %v248
        %v1349 = vunpack.c.l.b16 %v249
        %v1350 = vpack.c.b16 %v1349, %v1348
        %1351 = vrot.lane.b32.xlu0 %v317, 24
        %v1352 = vpop.permute.xlu0 %1351
        %1353 = vrot.lane.b32.xlu0 %v318, 24
        %v1354 = vpop.permute.xlu0 %1353
        %1355 = vrot.lane.b32.xlu0 %v319, 24
        %v1356 = vpop.permute.xlu0 %1355
        %1357 = vrot.lane.b32.xlu0 %v320, 24
        %v1358 = vpop.permute.xlu0 %1357
        %1359 = vrot.lane.b32.xlu0 %v321, 24
        %v1360 = vpop.permute.xlu0 %1359
        %1361 = vrot.lane.b32.xlu0 %v322, 24
        %v1362 = vpop.permute.xlu0 %1361
        %1363 = vrot.lane.b32.xlu0 %v323, 24
        %v1364 = vpop.permute.xlu0 %1363
        %1365 = vrot.lane.b32.xlu0 %v324, 24
        %v1366 = vpop.permute.xlu0 %1365
        %1367 = vrot.lane.b32.xlu0 %v325, 24
        %v1368 = vpop.permute.xlu0 %1367
        %1369 = vrot.lane.b32.xlu0 %v326, 24
        %v1370 = vpop.permute.xlu0 %1369
        %1371 = vrot.lane.b32.xlu0 %v327, 24
        %v1372 = vpop.permute.xlu0 %1371
        %1373 = vrot.lane.b32.xlu0 %v328, 24
        %v1374 = vpop.permute.xlu0 %1373
        %1375 = vrot.lane.b32.xlu0 %v329, 24
        %v1376 = vpop.permute.xlu0 %1375
        %1377 = vrot.lane.b32.xlu0 %v330, 24
        %v1378 = vpop.permute.xlu0 %1377
        %1379 = vrot.lane.b32.xlu0 %v1112, 24
        %v1380 = vpop.permute.xlu0 %1379
        %1381 = vrot.lane.b32.xlu0 %v1350, 24
        %v1382 = vpop.permute.xlu0 %1381
        %vm1399 = vcmask 228544
        %1400 = vst.msk [vmem:[#allocation2] sm:$0xff] %vm1399, %v1352
        %1401 = vst.msk [vmem:[#allocation2 + $0x8] sm:$0xff] %vm1399, %v1354
        %1402 = vst.msk [vmem:[#allocation2 + $0x10] sm:$0xff] %vm1399, %v1356
        %1403 = vst.msk [vmem:[#allocation2 + $0x18] sm:$0xff] %vm1399, %v1358
        %1404 = vst.msk [vmem:[#allocation2 + $0x20] sm:$0xff] %vm1399, %v1360
        %1405 = vst.msk [vmem:[#allocation2 + $0x28] sm:$0xff] %vm1399, %v1362
        %1406 = vst.msk [vmem:[#allocation2 + $0x30] sm:$0xff] %vm1399, %v1364
        %1407 = vst.msk [vmem:[#allocation2 + $0x38] sm:$0xff] %vm1399, %v1366
        %1408 = vst.msk [vmem:[#allocation2 + $0x40] sm:$0xff] %vm1399, %v1368
        %1409 = vst.msk [vmem:[#allocation2 + $0x48] sm:$0xff] %vm1399, %v1370
        %1410 = vst.msk [vmem:[#allocation2 + $0x50] sm:$0xff] %vm1399, %v1372
        %1411 = vst.msk [vmem:[#allocation2 + $0x58] sm:$0xff] %vm1399, %v1374
        %1412 = vst.msk [vmem:[#allocation2 + $0x60] sm:$0xff] %vm1399, %v1376
        %1413 = vst.msk [vmem:[#allocation2 + $0x68] sm:$0xff] %vm1399, %v1378
        %1414 = vst.msk [vmem:[#allocation2 + $0x70] sm:$0xff] %vm1399, %v1380
        %1415 = vst.msk [vmem:[#allocation2 + $0x78] sm:$0xff] %vm1399, %v1382
        %v1417 = vshrl.u32 %v248, 16
        %v1419 = vrot.slane %v1417, 4
        %v1420 = vshll.u32 %v248, 16
        %v1422 = vrot.slane %v1420, 5
        %v1423 = vor.u32 %v1419, %v1422
        %v1424 = vrot.slane %v1423, 4
        %v1426 = vshll.u32 %v249, 16
        %v1428 = vrot.slane %v1426, 5
        %v1429 = vsel %vm366, %v1424, %v1428
        %v1430 = vshrl.u32 %v249, 16
        %v1432 = vrot.slane %v1430, 4
        %v1433 = vor.u32 %v1432, %v1428
        %v1434 = vrot.slane %v1433, 4
        %v1436 = vshll.u32 %v250, 16
        %v1438 = vrot.slane %v1436, 5
        %v1439 = vsel %vm366, %v1434, %v1438
        %v1440 = vunpack.c.l.b16 %v1429
        %v1441 = vunpack.c.l.b16 %v1439
        %v1442 = vpack.c.b16 %v1441, %v1440
        %1443 = vrot.lane.b32.xlu0 %v785, 28
        %v1444 = vpop.permute.xlu0 %1443
        %1445 = vrot.lane.b32.xlu0 %v786, 28
        %v1446 = vpop.permute.xlu0 %1445
        %1447 = vrot.lane.b32.xlu0 %v787, 28
        %v1448 = vpop.permute.xlu0 %1447
        %1449 = vrot.lane.b32.xlu0 %v788, 28
        %v1450 = vpop.permute.xlu0 %1449
        %1451 = vrot.lane.b32.xlu0 %v789, 28
        %v1452 = vpop.permute.xlu0 %1451
        %1453 = vrot.lane.b32.xlu0 %v790, 28
        %v1454 = vpop.permute.xlu0 %1453
        %1455 = vrot.lane.b32.xlu0 %v791, 28
        %v1456 = vpop.permute.xlu0 %1455
        %1457 = vrot.lane.b32.xlu0 %v792, 28
        %v1458 = vpop.permute.xlu0 %1457
        %1459 = vrot.lane.b32.xlu0 %v793, 28
        %v1460 = vpop.permute.xlu0 %1459
        %1461 = vrot.lane.b32.xlu0 %v794, 28
        %v1462 = vpop.permute.xlu0 %1461
        %1463 = vrot.lane.b32.xlu0 %v795, 28
        %v1464 = vpop.permute.xlu0 %1463
        %1465 = vrot.lane.b32.xlu0 %v796, 28
        %v1466 = vpop.permute.xlu0 %1465
        %1467 = vrot.lane.b32.xlu0 %v797, 28
        %v1468 = vpop.permute.xlu0 %1467
        %1469 = vrot.lane.b32.xlu0 %v798, 28
        %v1470 = vpop.permute.xlu0 %1469
        %1471 = vrot.lane.b32.xlu0 %v1204, 28
        %v1472 = vpop.permute.xlu0 %1471
        %1473 = vrot.lane.b32.xlu0 %v1442, 28
        %v1474 = vpop.permute.xlu0 %1473
        %vm1491 = vcmask 261344
        %1492 = vst.msk [vmem:[#allocation2] sm:$0xff] %vm1491, %v1444
        %1493 = vst.msk [vmem:[#allocation2 + $0x8] sm:$0xff] %vm1491, %v1446
        %1494 = vst.msk [vmem:[#allocation2 + $0x10] sm:$0xff] %vm1491, %v1448
        %1495 = vst.msk [vmem:[#allocation2 + $0x18] sm:$0xff] %vm1491, %v1450
        %1496 = vst.msk [vmem:[#allocation2 + $0x20] sm:$0xff] %vm1491, %v1452
        %1497 = vst.msk [vmem:[#allocation2 + $0x28] sm:$0xff] %vm1491, %v1454
        %1498 = vst.msk [vmem:[#allocation2 + $0x30] sm:$0xff] %vm1491, %v1456
        %1499 = vst.msk [vmem:[#allocation2 + $0x38] sm:$0xff] %vm1491, %v1458
        %1500 = vst.msk [vmem:[#allocation2 + $0x40] sm:$0xff] %vm1491, %v1460
        %1501 = vst.msk [vmem:[#allocation2 + $0x48] sm:$0xff] %vm1491, %v1462
        %1502 = vst.msk [vmem:[#allocation2 + $0x50] sm:$0xff] %vm1491, %v1464
        %1503 = vst.msk [vmem:[#allocation2 + $0x58] sm:$0xff] %vm1491, %v1466
        %1504 = vst.msk [vmem:[#allocation2 + $0x60] sm:$0xff] %vm1491, %v1468
        %1505 = vst.msk [vmem:[#allocation2 + $0x68] sm:$0xff] %vm1491, %v1470
        %1506 = vst.msk [vmem:[#allocation2 + $0x70] sm:$0xff] %vm1491, %v1472
        %1507 = vst.msk [vmem:[#allocation2 + $0x78] sm:$0xff] %vm1491, %v1474
        %v1509 = vrot.slane %v248, 5
        %v1510 = vrot.slane %v1509, 4
        %v1511 = vrot.slane %v249, 5
        %v1512 = vsel %vm882, %v1510, %v1511
        %v1513 = vrot.slane %v1511, 4
        %v1514 = vrot.slane %v250, 5
        %v1515 = vsel %vm882, %v1513, %v1514
        %v1516 = vunpack.c.l.b16 %v1512
        %v1517 = vunpack.c.l.b16 %v1515
        %v1518 = vpack.c.b16 %v1517, %v1516
        %1519 = vrot.lane.b32.xlu0 %v1029, 32
        %v1520 = vpop.permute.xlu0 %1519
        %1521 = vrot.lane.b32.xlu0 %v1030, 32
        %v1522 = vpop.permute.xlu0 %1521
        %1523 = vrot.lane.b32.xlu0 %v1031, 32
        %v1524 = vpop.permute.xlu0 %1523
        %1525 = vrot.lane.b32.xlu0 %v1032, 32
        %v1526 = vpop.permute.xlu0 %1525
        %1527 = vrot.lane.b32.xlu0 %v1033, 32
        %v1528 = vpop.permute.xlu0 %1527
        %1529 = vrot.lane.b32.xlu0 %v1034, 32
        %v1530 = vpop.permute.xlu0 %1529
        %1531 = vrot.lane.b32.xlu0 %v1035, 32
        %v1532 = vpop.permute.xlu0 %1531
        %1533 = vrot.lane.b32.xlu0 %v1036, 32
        %v1534 = vpop.permute.xlu0 %1533
        %1535 = vrot.lane.b32.xlu0 %v1037, 32
        %v1536 = vpop.permute.xlu0 %1535
        %1537 = vrot.lane.b32.xlu0 %v1038, 32
        %v1538 = vpop.permute.xlu0 %1537
        %1539 = vrot.lane.b32.xlu0 %v1039, 32
        %v1540 = vpop.permute.xlu0 %1539
        %1541 = vrot.lane.b32.xlu0 %v1040, 32
        %v1542 = vpop.permute.xlu0 %1541
        %1543 = vrot.lane.b32.xlu0 %v1041, 32
        %v1544 = vpop.permute.xlu0 %1543
        %1545 = vrot.lane.b32.xlu0 %v1042, 32
        %v1546 = vpop.permute.xlu0 %1545
        %1547 = vrot.lane.b32.xlu0 %v1280, 32
        %v1548 = vpop.permute.xlu0 %1547
        %1549 = vrot.lane.b32.xlu0 %v1518, 32
        %v1550 = vpop.permute.xlu0 %1549
        %vm1567 = vcmask 294144
        %1568 = vst.msk [vmem:[#allocation2] sm:$0xff] %vm1567, %v1520
        %1569 = vst.msk [vmem:[#allocation2 + $0x8] sm:$0xff] %vm1567, %v1522
        %1570 = vst.msk [vmem:[#allocation2 + $0x10] sm:$0xff] %vm1567, %v1524
        %1571 = vst.msk [vmem:[#allocation2 + $0x18] sm:$0xff] %vm1567, %v1526
        %1572 = vst.msk [vmem:[#allocation2 + $0x20] sm:$0xff] %vm1567, %v1528
        %1573 = vst.msk [vmem:[#allocation2 + $0x28] sm:$0xff] %vm1567, %v1530
        %1574 = vst.msk [vmem:[#allocation2 + $0x30] sm:$0xff] %vm1567, %v1532
        %1575 = vst.msk [vmem:[#allocation2 + $0x38] sm:$0xff] %vm1567, %v1534
        %1576 = vst.msk [vmem:[#allocation2 + $0x40] sm:$0xff] %vm1567, %v1536
        %1577 = vst.msk [vmem:[#allocation2 + $0x48] sm:$0xff] %vm1567, %v1538
        %1578 = vst.msk [vmem:[#allocation2 + $0x50] sm:$0xff] %vm1567, %v1540
        %1579 = vst.msk [vmem:[#allocation2 + $0x58] sm:$0xff] %vm1567, %v1542
        %1580 = vst.msk [vmem:[#allocation2 + $0x60] sm:$0xff] %vm1567, %v1544
        %1581 = vst.msk [vmem:[#allocation2 + $0x68] sm:$0xff] %vm1567, %v1546
        %1582 = vst.msk [vmem:[#allocation2 + $0x70] sm:$0xff] %vm1567, %v1548
        %1583 = vst.msk [vmem:[#allocation2 + $0x78] sm:$0xff] %vm1567, %v1550
        %v1584 = vld [vmem:[%s1] sm:$0xf]
        %v1585 = vld [vmem:[#allocation2] sm:$0xff]
        %v1586 = vld [vmem:[#allocation2 + $0x8] sm:$0xff]
        %v1587 = vld [vmem:[#allocation2 + $0x10] sm:$0xff]
        %v1588 = vld [vmem:[#allocation2 + $0x18] sm:$0xff]
        %v1589 = vld [vmem:[#allocation2 + $0x20] sm:$0xff]
        %v1590 = vld [vmem:[#allocation2 + $0x28] sm:$0xff]
        %v1591 = vld [vmem:[#allocation2 + $0x30] sm:$0xff]
        %v1592 = vld [vmem:[#allocation2 + $0x38] sm:$0xff]
        %v1593 = vld [vmem:[#allocation2 + $0x40] sm:$0xff]
        %v1594 = vld [vmem:[#allocation2 + $0x48] sm:$0xff]
        %v1595 = vld [vmem:[#allocation2 + $0x50] sm:$0xff]
        %v1596 = vld [vmem:[#allocation2 + $0x58] sm:$0xff]
        %v1597 = vld [vmem:[#allocation2 + $0x60] sm:$0xff]
        %v1598 = vld [vmem:[#allocation2 + $0x68] sm:$0xff]
        %v1599 = vld [vmem:[#allocation2 + $0x70] sm:$0xff]
        %v1600 = vld [vmem:[#allocation2 + $0x78] sm:$0xff]
        %vm1601 = vcmask 293888
        %v1603 = vsel %vm1601, %v1584, 0
        %v1606 = vsel %vm1601, %v1585, 0
        %v1609 = vsel %vm1601, %v1586, 0
        %v1612 = vsel %vm1601, %v1587, 0
        %v1615 = vsel %vm1601, %v1588, 0
        %v1618 = vsel %vm1601, %v1589, 0
        %v1621 = vsel %vm1601, %v1590, 0
        %v1624 = vsel %vm1601, %v1591, 0
        %v1627 = vsel %vm1601, %v1592, 0
        %v1630 = vsel %vm1601, %v1593, 0
        %v1633 = vsel %vm1601, %v1594, 0
        %v1636 = vsel %vm1601, %v1595, 0
        %v1639 = vsel %vm1601, %v1596, 0
        %v1642 = vsel %vm1601, %v1597, 0
        %v1645 = vsel %vm1601, %v1598, 0
        %v1648 = vsel %vm1601, %v1599, 0
        %v1651 = vsel %vm1601, %v1600, 0
        %1653 = vmatprep.subr.bf16.mxu0 0
        %1654 = vmatpush1.bf16.xpose.msra.mxu0 %v1606
        %1655 = vmatprep.subr.bf16.mxu0 0
        %1656 = vmatpush1.bf16.xpose.msra.mxu0 %v1609
        %1657 = vmatprep.subr.bf16.mxu0 0
        %1658 = vmatpush1.bf16.xpose.msra.mxu0 %v1612
        %1659 = vmatprep.subr.bf16.mxu0 0
        %1660 = vmatpush1.bf16.xpose.msra.mxu0 %v1615
        %1661 = vmatprep.subr.bf16.mxu0 0
        %1662 = vmatpush1.bf16.xpose.msra.mxu0 %v1618
        %1663 = vmatprep.subr.bf16.mxu0 0
        %1664 = vmatpush1.bf16.xpose.msra.mxu0 %v1621
        %1665 = vmatprep.subr.bf16.mxu0 0
        %1666 = vmatpush1.bf16.xpose.msra.mxu0 %v1624
        %1667 = vmatprep.subr.bf16.mxu0 0
        %1668 = vmatpush1.bf16.xpose.msra.mxu0 %v1627
        %1669 = vmatprep.subr.bf16.mxu0 0
        %1670 = vmatpush1.bf16.xpose.msra.mxu0 %v1630
        %1671 = vmatprep.subr.bf16.mxu0 0
        %1672 = vmatpush1.bf16.xpose.msra.mxu0 %v1633
        %1673 = vmatprep.subr.bf16.mxu0 0
        %1674 = vmatpush1.bf16.xpose.msra.mxu0 %v1636
        %1675 = vmatprep.subr.bf16.mxu0 0
        %1676 = vmatpush1.bf16.xpose.msra.mxu0 %v1639
        %1677 = vmatprep.subr.bf16.mxu0 0
        %1678 = vmatpush1.bf16.xpose.msra.mxu0 %v1642
        %1679 = vmatprep.subr.bf16.mxu0 0
        %1680 = vmatpush1.bf16.xpose.msra.mxu0 %v1645
        %1681 = vmatprep.subr.bf16.mxu0 0
        %1682 = vmatpush1.bf16.xpose.msra.mxu0 %v1648
        %1683 = vmatprep.subr.bf16.mxu0 0
        %1684 = vmatpush1.bf16.xpose.msra.mxu0 %v1651
        %1685 = vmatprep.mubr.bf16.mxu0 0
        %1686 = vmatmul.mubr.bf16.gmra.mrb[0].mxu0 %v1603
        %v1687 = vpop.f32.mrb[0].mxu0
        %v1688 = vadd.f32 0.0, %v1687
        %v1689 = vpop.f32.mrb[0].mxu0
        %v1690 = vadd.f32 0.0, %v1689
        %v1691 = vpop.f32.mrb[0].mxu0
        %v1692 = vpop.f32.mrb[0].mxu0
        %1693 = vdwg.mxu0
        %v1694 = vld [vmem:[%s2] sm:$0xff]
        %1696 = vset.pattern.permute.xlu0 0
        %1697 = vperm.xlu0 %1696, %v1694
        %v1698 = vpop.permute.xlu0 %1697
        %v1700 = vmul.f32 %v1688, %v1698
        %v1701 = vmul.f32 %v1690, %v1698
        %v1702 = vld [vmem:[%s3] sm:$0xff]
        %1704 = vset.pattern.permute.xlu0 0
        %1705 = vperm.xlu0 %1704, %v1702
        %v1706 = vpop.permute.xlu0 %1705
        %v1708 = vadd.f32 %v1700, %v1706
        %v1709 = vadd.f32 %v1701, %v1706
        %v1710 = vxor.u32 %v1708, 2147483648
        %v1711 = vxor.u32 %v1709, 2147483648
        %v1712 = vmul.f32 %v1710, 1.442695
        %v1713 = vpow.pop %v1712
        %v1714 = vmul.f32 %v1711, 1.442695
        %v1715 = vpow.pop %v1714
        %v1716 = vadd.f32 %v1713, 1.0
        %v1717 = vadd.f32 %v1715, 1.0
        %v1718 = vrcp.pop %v1716
        %v1719 = vmul.f32 1.0, %v1718
        %v1720 = vrcp.pop %v1717
        %v1721 = vmul.f32 1.0, %v1720
        %v1722 = vmul.f32 %v1708, %v1719
        %v1723 = vmul.f32 %v1709, %v1721
        %v1724 = vpack.c.bf16 %v1722, %v1722
        %v1725 = vpack.c.bf16 %v1723, %v1723
        %v1728 = vunpack.c.l.b16 %v1724
        %v1729 = vunpack.c.l.b16 %v1725
        %v1730 = vpack.c.b16 %v1729, %v1728
        %1732 = vst [vmem:[%s190] sm:$0xff] %v1730
        %s1733 = sand.u32 %s115, 1
        %s1734 = scalar_lea.sflag [#allocation4], %s1733
        %s1735 = sand.u32 %s115, 1
        %s1736 = smul.addr %s1735, 8
        %s1737 = scalar_lea.vmem [#allocation3], %s1736
        // Predicated region
        $region37: #{tpu_custom_call.1} parent=35 // pred_check
          %p1738 = pneg %p125
        $region38: #{tpu_custom_call.1} parent=35 // pred_check_branch
          %1740 = sbr.rel (%p1738) target = $region40
        $region39: #{tpu_custom_call.1} parent=35 // pred_region
          %s1742 = ssub.s32 128, 128
          %1743 = vsyncadd %s1734, %s1742
          %s1744 = smul.addr %s18, 2
          %s1745 = smul.addr %s1744, 64
          %s1746 = scalar_lea.hbm %s4, %s1745
          %s1748 = sshll.u32 %s1737, 4
          %s1749 = int_to_ptr.vmem [resolvable:$true] %s1748
          %1751 = dma.vmem_to_hbm [thread:$0]  %s1749, 128, %s1746, %s1734
        $region40: #{tpu_custom_call.1} parent=35 // pred_fallthru
          _
      $region36: #{tpu_custom_call.1} parent=5 // pred_fallthru
        _
      %p1752 = scmp.le.s32.totalorder 2, %s13
      // Predicated region
      $region41: #{tpu_custom_call.1} parent=5 // pred_check
        %p1753 = pneg %p1752
      $region42: #{tpu_custom_call.1} parent=5 // pred_check_branch
        %1755 = sbr.rel (%p1753) target = $region44
      $region43: #{tpu_custom_call.1} parent=5 // pred_region
        %s1756 = ssub.s32 %s13, 2
        // Predicated region
        $region45: #{tpu_custom_call.1} parent=43 // pred_check
          %p1757 = pneg %p131
        $region46: #{tpu_custom_call.1} parent=43 // pred_check_branch
          %1759 = sbr.rel (%p1757) target = $region48
        $region47: #{tpu_custom_call.1} parent=43 // pred_region
          %s1760 = sand.u32 %s116, 1
          %s1761 = scalar_lea.sflag [#allocation4], %s1760
          %s1762 = sand.u32 %s116, 1
          %s1763 = smul.addr %s1762, 8
          %s1764 = scalar_lea.vmem [#allocation3], %s1763
          %1765 = dma.done %s1761, 128
        $region48: #{tpu_custom_call.1} parent=43 // pred_fallthru
          _
      $region44: #{tpu_custom_call.1} parent=5 // pred_fallthru
        _
    $region6: #{tpu_custom_call.1} parent=1 // loop_footer
      %s17 = sadd.s32 1, %s13
    $region7: #{tpu_custom_call.1} parent=1 // loop_footer_branch
      %12 = sbr.rel target = $region3
    $region8: #{tpu_custom_call.1} parent=1 // loop_exit
      _
    %1766 = vsyncpa [#allocation4], 1
    %s1767 = scalar_lea.sflag [#allocation4], 1
    %1768 = vsyncpa %s1767, 1

</llo_original>
